<compile_context>
chip_gen: v5e
topology: v5e:2x2
jax: 0.10.0
libtpu: 0.0.40
codegen_flags: <defaults>
</compile_context>

<pallas_src>
import jax
import jax.numpy as jnp
from jax import lax
from jax.experimental import pallas as pl
from jax.experimental.pallas import tpu as pltpu

# ---- Constants (synthetic, small) ----
VOCAB_SIZE = 65
BLOCK_SIZE = 8                    # max sequence length T
N_EMBED = 32                      # NUMBER_OF_EMBEDDING_DIMENSIONS
N_HEADS = 4
N_LAYERS = 2
HEAD_SIZE = N_EMBED // N_HEADS
LN_EPS = 1e-5                     # PyTorch nn.LayerNorm default
VPAD = 128                        # lane-padded vocab (logits store / token one-hot columns)
EMB_ROWS = VPAD + BLOCK_SIZE      # packed table: rows [0,128) = tokens, [128,136) = positions

# Flip to jnp.bfloat16 to halve weight DMA bytes; cast happens ONCE in init (bf16 MXU
# operands are fine on v5e/v6e/v7x; accumulation stays f32).  f32 keeps reference numerics.
MXU_DTYPE = jnp.float32


def _layer_norm(v, g, b):
    mu = jnp.mean(v, axis=-1, keepdims=True)
    var = jnp.mean((v - mu) ** 2, axis=-1, keepdims=True)
    return (v - mu) * lax.rsqrt(var + LN_EPS) * g + b


def _mm(a, w):
    """2-D matmul with f32 accumulation; activation cast only if weights were pre-cast."""
    if w.dtype != jnp.float32:
        a = a.astype(w.dtype)
    return jnp.dot(a, w, preferred_element_type=jnp.float32)


def fused_forward_kernel(idt_ref, emb_ref, wqkv_ref, wproj_ref, w1_ref, w2_ref,
                         vec_ref, lm_ref, out_ref, loss_ref):
    B, T, _ = out_ref.shape
    C, H, D = N_EMBED, N_HEADS, HEAD_SIZE
    BT = B * T

    # ---- fused token + position embedding: one-hot @ packed table (no XLA gather) ----
    idt = idt_ref[...]                                   # (BT, 2) int32: [token id, target]
    ids3 = idt[:, 0:1].reshape(B, T, 1)
    tgt = idt[:, 1:2]                                    # (BT, 1)
    c_idx = lax.broadcasted_iota(jnp.int32, (B, T, EMB_ROWS), 2)
    t_idx = lax.broadcasted_iota(jnp.int32, (B, T, EMB_ROWS), 1)
    onehot = jnp.logical_or(c_idx == ids3, c_idx == t_idx + VPAD).astype(jnp.float32)
    x = _mm(onehot.reshape(BT, EMB_ROWS), emb_ref[...])  # (BT, C) = tok_emb[id] + pos_emb[t]

    # ---- constants hoisted out of the layer loop (JAX does not CSE broadcasts) ----
    ti = lax.broadcasted_iota(jnp.int32, (B, T, T, H), 1)
    ui = lax.broadcasted_iota(jnp.int32, (B, T, T, H), 2)
    amask = jnp.where(ti >= ui, 0.0, -1e30)              # additive causal mask, full shape
    # head-pooling matrices: pool[c,h] = 1 iff lane c belongs to head h (c // D == h)
    ci = lax.broadcasted_iota(jnp.int32, (C, H), 0)
    hi = lax.broadcasted_iota(jnp.int32, (C, H), 1)
    pool = jnp.logical_and(ci >= hi * D, ci < (hi + 1) * D).astype(jnp.float32)      # (C, H)
    ci2 = lax.broadcasted_iota(jnp.int32, (H, C), 1)
    hi2 = lax.broadcasted_iota(jnp.int32, (H, C), 0)
    poolT = jnp.logical_and(ci2 >= hi2 * D, ci2 < (hi2 + 1) * D).astype(jnp.float32)  # (H, C)

    for l in range(N_LAYERS):                            # static unroll, L = 2
        vec = vec_ref[l]                                 # (8, 128) packed per-layer vectors
        ln1_g, ln1_b = vec[0:1, :C], vec[1:2, :C]
        ln2_g, ln2_b = vec[2:3, :C], vec[3:4, :C]
        bproj, b2 = vec[4:5, :C], vec[5:6, :C]
        b1 = vec[6:7, :]                                 # (1, 4C) = (1, 128)

        # ---- multi-head attention: heads stay in the lane dim (no fold/unfold relayouts)
        xn = _layer_norm(x, ln1_g, ln1_b)
        qkv = _mm(xn, wqkv_ref[l])                       # (BT, 3C); C**-0.5 folded into q cols
        q = qkv[:, 0 * C:1 * C].reshape(B, T, C)
        k = qkv[:, 1 * C:2 * C].reshape(B, T, C)
        v = qkv[:, 2 * C:3 * C].reshape(B, T, C)

        e = q[:, :, None, :] * k[:, None, :, :]          # (B, T, S, C)  VPU elementwise
        s = _mm(e.reshape(BT * T, C), pool).reshape(B, T, T, H) + amask   # per-head scores
        # max-subtraction dropped on purpose: scores are tiny and the mask is finite
        # (exp(-1e30) -> 0), so softmax cannot overflow / NaN here.
        p = jnp.exp(s)
        w = p * pl.reciprocal(jnp.sum(p, axis=2, keepdims=True), approx=True)
        wexp = _mm(w.reshape(BT * T, H), poolT).reshape(B, T, T, C)        # un-pool per head
        o = jnp.sum(wexp * v[:, None, :, :], axis=2)     # (B, T, C): heads concat'ed in lanes
        x = x + _mm(o.reshape(BT, C), wproj_ref[l]) + bproj

        # ---- feed-forward: Linear -> ReLU -> Linear ----
        x2n = _layer_norm(x, ln2_g, ln2_b)
        h1 = jnp.maximum(_mm(x2n, w1_ref[l]) + b1, 0.0)
        x = x + _mm(h1, w2_ref[l]) + b2

    # NOTE: the reference forward never applies layer_norm_final -> skipped on purpose.
    lm = lm_ref[...]                                     # (40, 128): rows [0,32)=W, row 32=b
    logits = _mm(x, lm[0:C, :]) + lm[C:C + 1, :]         # (BT, VPAD), lane-dense
    out_ref[...] = logits.reshape(B, T, VPAD).astype(out_ref.dtype)

    # ---- in-kernel cross-entropy on the padded logits (padded vocab columns masked) ----
    vc = lax.broadcasted_iota(jnp.int32, (BT, VPAD), 1)
    ml = jnp.where(vc < VOCAB_SIZE, logits, -1e30)
    m = jnp.max(ml, axis=-1, keepdims=True)
    lse = m + jnp.log(jnp.sum(jnp.exp(ml - m), axis=-1, keepdims=True))
    logit_t = jnp.sum(jnp.where(vc == tgt, logits, 0.0), axis=-1, keepdims=True)
    loss_ref[...] = jnp.mean(lse - logit_t, keepdims=True)      # (1, 1)


def _vspec():
    return pl.BlockSpec(memory_space=pltpu.MemorySpace.VMEM)


def run_forward_kernel(idt, emb_pack, stacked, lm_pack, B, T):
    args = (idt, emb_pack, stacked['wqkv'], stacked['wproj'], stacked['w1'],
            stacked['w2'], stacked['vecs'], lm_pack)
    # Single fused invocation: the whole working set (<150 KB) fits VMEM on every
    # generation (v5e/v6e 128 MiB, v7x 64 MiB).
    # TODO(synk): when B*T scales, grid the B*T row axis with
    # dimension_semantics=("parallel",) to use both v7x TensorCores, re-derive the row
    # tile against v7x's 64 MiB VMEM (vmem_limit_bytes), and store bf16 logits.
    return pl.pallas_call(
        fused_forward_kernel,
        out_shape=(jax.ShapeDtypeStruct((B, T, VPAD), jnp.float32),
                   jax.ShapeDtypeStruct((1, 1), jnp.float32)),
        in_specs=[_vspec() for _ in args],
        out_specs=(_vspec(), _vspec()),
    )(*args)


def init_params(key):
    def nrm(k, shape, std=0.02):
        return jax.random.normal(k, shape, jnp.float32) * std

    C = N_EMBED
    keys = jax.random.split(key, 4 + N_LAYERS)

    # Packed embedding table: rows [0,VOCAB) token embeddings, rows [128,136) position emb.
    tok = nrm(keys[0], (VOCAB_SIZE, C))
    pos = nrm(keys[1], (BLOCK_SIZE, C))
    emb_pack = (jnp.zeros((EMB_ROWS, C), jnp.float32)
                .at[:VOCAB_SIZE].set(tok)
                .at[VPAD:VPAD + BLOCK_SIZE].set(pos))

    # Packed lm_head: rows [0,32) = W (vocab lane-padded to 128), row 32 = bias.
    lm_w = nrm(keys[2], (C, VOCAB_SIZE))
    lm_b = nrm(keys[3], (VOCAB_SIZE,))
    lm_pack = (jnp.zeros((40, VPAD), jnp.float32)
               .at[:C, :VOCAB_SIZE].set(lm_w)
               .at[C, :VOCAB_SIZE].set(lm_b))

    scale = C ** (-0.5)          # reference scale (embed dim); folded into the Q columns
    per_layer = []
    for li in range(N_LAYERS):
        bk = jax.random.split(keys[4 + li], 8)
        wq, wk, wv = nrm(bk[0], (C, C)), nrm(bk[1], (C, C)), nrm(bk[2], (C, C))
        # Packed per-layer vectors, 8 rows x 128 lanes:
        #   0 ln1_g, 1 ln1_b, 2 ln2_g, 3 ln2_b, 4 bproj, 5 b2 (each in lanes [0,32)),
        #   6 b1 (full 128 lanes), 7 unused.  Zero rows = zero-initialised biases.
        vec = (jnp.zeros((8, VPAD), jnp.float32)
               .at[0, :C].set(1.0)                       # ln1 gamma
               .at[2, :C].set(1.0)                       # ln2 gamma
               .at[4, :C].set(nrm(bk[4], (C,))))         # projection bias
        per_layer.append({
            'wqkv': jnp.concatenate([wq * scale, wk, wv], axis=1),   # fused (C, 3C)
            'wproj': nrm(bk[3], (C, C)),
            'w1': nrm(bk[5], (C, 4 * C)),
            'w2': nrm(bk[6], (4 * C, C)),
            'vecs': vec,
        })
    stacked = {k: jnp.stack([p[k] for p in per_layer], axis=0) for k in per_layer[0]}
    for k in ('wqkv', 'wproj', 'w1', 'w2'):
        stacked[k] = stacked[k].astype(MXU_DTYPE)        # one-time cast (no in-kernel casts)
    return {'emb_pack': emb_pack, 'lm_pack': lm_pack, 'stacked': stacked}


def forward(params, inputs, targets=None):
    B, T = inputs.shape
    tg = targets if targets is not None else jnp.zeros_like(inputs)
    idt = jnp.stack([inputs.reshape(B * T), tg.reshape(B * T)], axis=1).astype(jnp.int32)
    logits_pad, loss11 = run_forward_kernel(idt, params['emb_pack'], params['stacked'],
                                            params['lm_pack'], B, T)
    logits = logits_pad[..., :VOCAB_SIZE]
    loss = loss11[0, 0] if targets is not None else None
    return logits, loss


if __name__ == "__main__":
    key = jax.random.PRNGKey(0)
    pkey, ikey, tkey = jax.random.split(key, 3)

    params = init_params(pkey)
    B, T = 2, BLOCK_SIZE
    inputs = jax.random.randint(ikey, (B, T), 0, VOCAB_SIZE, dtype=jnp.int32)
    targets = jax.random.randint(tkey, (B, T), 0, VOCAB_SIZE, dtype=jnp.int32)

    logits, loss = forward(params, inputs, targets)
    jax.block_until_ready(logits)
    jax.block_until_ready(loss)

    assert logits.shape == (B, T, VOCAB_SIZE), logits.shape
    assert loss.shape == (), loss.shape
    print("KERNEL_OK")
</pallas_src>

<mosaic_0001>
module attributes {stable_mosaic.version = 11 : i64} {
  func.func @fused_forward_kernel(%arg0: memref<16x2xi32, #tpu.memory_space<vmem>>, %arg1: memref<136x32xf32, #tpu.memory_space<vmem>>, %arg2: memref<2x32x96xf32, #tpu.memory_space<vmem>>, %arg3: memref<2x32x32xf32, #tpu.memory_space<vmem>>, %arg4: memref<2x32x128xf32, #tpu.memory_space<vmem>>, %arg5: memref<2x128x32xf32, #tpu.memory_space<vmem>>, %arg6: memref<2x8x128xf32, #tpu.memory_space<vmem>>, %arg7: memref<40x128xf32, #tpu.memory_space<vmem>>, %arg8: memref<2x8x128xf32, #tpu.memory_space<vmem>>, %arg9: memref<1x1xf32, #tpu.memory_space<vmem>>) attributes {dimension_semantics = [], scalar_prefetch = 0 : i64, scratch_operands = 0 : i64, tpu.core_type = #tpu.core_type<tc>} {
    %c0 = arith.constant 0 : index
    %c0_0 = arith.constant 0 : index
    %0 = vector.load %arg0[%c0, %c0_0] : memref<16x2xi32, #tpu.memory_space<vmem>>, vector<16x2xi32>
    %1 = vector.extract_strided_slice %0 {offsets = [0, 0], sizes = [16, 1], strides = [1, 1]} : vector<16x2xi32> to vector<16x1xi32>
    %2 = vector.shape_cast %1 : vector<16x1xi32> to vector<2x8x1xi32>
    %3 = vector.extract_strided_slice %0 {offsets = [0, 1], sizes = [16, 1], strides = [1, 1]} : vector<16x2xi32> to vector<16x1xi32>
    %4 = tpu.iota {dimensions = array<i32: 2>} : vector<2x8x136xi32>
    %5 = tpu.iota {dimensions = array<i32: 1>} : vector<2x8x136xi32>
    %6 = vector.broadcast %2 : vector<2x8x1xi32> to vector<2x8x136xi32>
    %7 = arith.cmpi eq, %4, %6 : vector<2x8x136xi32>
    %c128_i32 = arith.constant 128 : i32
    %8 = vector.broadcast %c128_i32 : i32 to vector<2x8x136xi32>
    %9 = arith.addi %5, %8 : vector<2x8x136xi32>
    %10 = arith.cmpi eq, %4, %9 : vector<2x8x136xi32>
    %11 = arith.ori %7, %10 : vector<2x8x136xi1>
    %12 = arith.extui %11 : vector<2x8x136xi1> to vector<2x8x136xi32>
    %13 = arith.sitofp %12 : vector<2x8x136xi32> to vector<2x8x136xf32>
    %14 = vector.shape_cast %13 : vector<2x8x136xf32> to vector<16x136xf32>
    %c0_1 = arith.constant 0 : index
    %c0_2 = arith.constant 0 : index
    %15 = vector.load %arg1[%c0_1, %c0_2] : memref<136x32xf32, #tpu.memory_space<vmem>>, vector<136x32xf32>
    %cst = arith.constant dense<0.000000e+00> : vector<16x32xf32>
    %16 = tpu.matmul %14, %15, %cst {dimension_numbers = #tpu.dot_dimension_numbers<[1], [0], [0], [1], [0, 0, 1, 1], [], []>} : vector<16x136xf32>, vector<136x32xf32>, vector<16x32xf32> -> vector<16x32xf32>
    %17 = tpu.iota {dimensions = array<i32: 1>} : vector<2x8x8x4xi32>
    %18 = tpu.iota {dimensions = array<i32: 2>} : vector<2x8x8x4xi32>
    %19 = arith.cmpi sge, %17, %18 : vector<2x8x8x4xi32>
    %cst_3 = arith.constant 0.000000e+00 : f32
    %cst_4 = arith.constant -1.000000e+30 : f32
    %20 = vector.broadcast %cst_3 : f32 to vector<2x8x8x4xf32>
    %21 = vector.broadcast %cst_4 : f32 to vector<2x8x8x4xf32>
    %22 = arith.select %19, %20, %21 : vector<2x8x8x4xi1>, vector<2x8x8x4xf32>
    %23 = tpu.iota {dimensions = array<i32: 0>} : vector<32x4xi32>
    %24 = tpu.iota {dimensions = array<i32: 1>} : vector<32x4xi32>
    %c8_i32 = arith.constant 8 : i32
    %25 = vector.broadcast %c8_i32 : i32 to vector<32x4xi32>
    %26 = arith.muli %24, %25 : vector<32x4xi32>
    %27 = arith.cmpi sge, %23, %26 : vector<32x4xi32>
    %c1_i32 = arith.constant 1 : i32
    %28 = vector.broadcast %c1_i32 : i32 to vector<32x4xi32>
    %29 = arith.addi %24, %28 : vector<32x4xi32>
    %c8_i32_5 = arith.constant 8 : i32
    %30 = vector.broadcast %c8_i32_5 : i32 to vector<32x4xi32>
    %31 = arith.muli %29, %30 : vector<32x4xi32>
    %32 = arith.cmpi slt, %23, %31 : vector<32x4xi32>
    %33 = arith.andi %27, %32 : vector<32x4xi1>
    %34 = arith.extui %33 : vector<32x4xi1> to vector<32x4xi32>
    %35 = arith.sitofp %34 : vector<32x4xi32> to vector<32x4xf32>
    %36 = tpu.iota {dimensions = array<i32: 1>} : vector<4x32xi32>
    %37 = tpu.iota {dimensions = array<i32: 0>} : vector<4x32xi32>
    %c8_i32_6 = arith.constant 8 : i32
    %38 = vector.broadcast %c8_i32_6 : i32 to vector<4x32xi32>
    %39 = arith.muli %37, %38 : vector<4x32xi32>
    %40 = arith.cmpi sge, %36, %39 : vector<4x32xi32>
    %c1_i32_7 = arith.constant 1 : i32
    %41 = vector.broadcast %c1_i32_7 : i32 to vector<4x32xi32>
    %42 = arith.addi %37, %41 : vector<4x32xi32>
    %c8_i32_8 = arith.constant 8 : i32
    %43 = vector.broadcast %c8_i32_8 : i32 to vector<4x32xi32>
    %44 = arith.muli %42, %43 : vector<4x32xi32>
    %45 = arith.cmpi slt, %36, %44 : vector<4x32xi32>
    %46 = arith.andi %40, %45 : vector<4x32xi1>
    %47 = arith.extui %46 : vector<4x32xi1> to vector<4x32xi32>
    %48 = arith.sitofp %47 : vector<4x32xi32> to vector<4x32xf32>
    %c0_9 = arith.constant 0 : index
    %c0_10 = arith.constant 0 : index
    %c0_11 = arith.constant 0 : index
    %49 = vector.load %arg6[%c0_9, %c0_10, %c0_11] : memref<2x8x128xf32, #tpu.memory_space<vmem>>, vector<1x8x128xf32>
    %50 = vector.shape_cast %49 : vector<1x8x128xf32> to vector<8x128xf32>
    %51 = vector.extract_strided_slice %50 {offsets = [0, 0], sizes = [1, 32], strides = [1, 1]} : vector<8x128xf32> to vector<1x32xf32>
    %52 = vector.extract_strided_slice %50 {offsets = [1, 0], sizes = [1, 32], strides = [1, 1]} : vector<8x128xf32> to vector<1x32xf32>
    %53 = vector.extract_strided_slice %50 {offsets = [2, 0], sizes = [1, 32], strides = [1, 1]} : vector<8x128xf32> to vector<1x32xf32>
    %54 = vector.extract_strided_slice %50 {offsets = [3, 0], sizes = [1, 32], strides = [1, 1]} : vector<8x128xf32> to vector<1x32xf32>
    %55 = vector.extract_strided_slice %50 {offsets = [4, 0], sizes = [1, 32], strides = [1, 1]} : vector<8x128xf32> to vector<1x32xf32>
    %56 = vector.extract_strided_slice %50 {offsets = [5, 0], sizes = [1, 32], strides = [1, 1]} : vector<8x128xf32> to vector<1x32xf32>
    %57 = vector.extract_strided_slice %50 {offsets = [6, 0], sizes = [1, 128], strides = [1, 1]} : vector<8x128xf32> to vector<1x128xf32>
    %cst_12 = arith.constant dense<0.000000e+00> : vector<16xf32>
    %58 = vector.multi_reduction <add>, %16, %cst_12 [1] : vector<16x32xf32> to vector<16xf32>
    %59 = vector.shape_cast %58 : vector<16xf32> to vector<16x1xf32>
    %cst_13 = arith.constant 3.200000e+01 : f32
    %60 = vector.broadcast %cst_13 : f32 to vector<16x1xf32>
    %61 = arith.divf %59, %60 : vector<16x1xf32>
    %62 = vector.broadcast %61 : vector<16x1xf32> to vector<16x32xf32>
    %63 = arith.subf %16, %62 : vector<16x32xf32>
    %64 = arith.mulf %63, %63 : vector<16x32xf32>
    %cst_14 = arith.constant dense<0.000000e+00> : vector<16xf32>
    %65 = vector.multi_reduction <add>, %64, %cst_14 [1] : vector<16x32xf32> to vector<16xf32>
    %66 = vector.shape_cast %65 : vector<16xf32> to vector<16x1xf32>
    %cst_15 = arith.constant 3.200000e+01 : f32
    %67 = vector.broadcast %cst_15 : f32 to vector<16x1xf32>
    %68 = arith.divf %66, %67 : vector<16x1xf32>
    %69 = vector.broadcast %61 : vector<16x1xf32> to vector<16x32xf32>
    %70 = arith.subf %16, %69 : vector<16x32xf32>
    %cst_16 = arith.constant 9.99999974E-6 : f32
    %71 = vector.broadcast %cst_16 : f32 to vector<16x1xf32>
    %72 = arith.addf %68, %71 : vector<16x1xf32>
    %73 = math.rsqrt %72 : vector<16x1xf32>
    %74 = vector.broadcast %73 : vector<16x1xf32> to vector<16x32xf32>
    %75 = arith.mulf %70, %74 : vector<16x32xf32>
    %76 = vector.broadcast %51 : vector<1x32xf32> to vector<16x32xf32>
    %77 = arith.mulf %75, %76 : vector<16x32xf32>
    %78 = vector.broadcast %52 : vector<1x32xf32> to vector<16x32xf32>
    %79 = arith.addf %77, %78 : vector<16x32xf32>
    %c0_17 = arith.constant 0 : index
    %c0_18 = arith.constant 0 : index
    %c0_19 = arith.constant 0 : index
    %80 = vector.load %arg2[%c0_17, %c0_18, %c0_19] : memref<2x32x96xf32, #tpu.memory_space<vmem>>, vector<1x32x96xf32>
    %81 = vector.shape_cast %80 : vector<1x32x96xf32> to vector<32x96xf32>
    %cst_20 = arith.constant dense<0.000000e+00> : vector<16x96xf32>
    %82 = tpu.matmul %79, %81, %cst_20 {dimension_numbers = #tpu.dot_dimension_numbers<[1], [0], [0], [1], [0, 0, 1, 1], [], []>} : vector<16x32xf32>, vector<32x96xf32>, vector<16x96xf32> -> vector<16x96xf32>
    %83 = vector.extract_strided_slice %82 {offsets = [0, 0], sizes = [16, 32], strides = [1, 1]} : vector<16x96xf32> to vector<16x32xf32>
    %84 = vector.shape_cast %83 : vector<16x32xf32> to vector<2x8x32xf32>
    %85 = vector.extract_strided_slice %82 {offsets = [0, 32], sizes = [16, 32], strides = [1, 1]} : vector<16x96xf32> to vector<16x32xf32>
    %86 = vector.shape_cast %85 : vector<16x32xf32> to vector<2x8x32xf32>
    %87 = vector.extract_strided_slice %82 {offsets = [0, 64], sizes = [16, 32], strides = [1, 1]} : vector<16x96xf32> to vector<16x32xf32>
    %88 = vector.shape_cast %87 : vector<16x32xf32> to vector<2x8x32xf32>
    %89 = vector.shape_cast %84 : vector<2x8x32xf32> to vector<2x8x1x32xf32>
    %90 = vector.shape_cast %86 : vector<2x8x32xf32> to vector<2x1x8x32xf32>
    %91 = vector.broadcast %89 : vector<2x8x1x32xf32> to vector<2x8x8x32xf32>
    %92 = vector.broadcast %90 : vector<2x1x8x32xf32> to vector<2x8x8x32xf32>
    %93 = arith.mulf %91, %92 : vector<2x8x8x32xf32>
    %94 = vector.shape_cast %93 : vector<2x8x8x32xf32> to vector<128x32xf32>
    %cst_21 = arith.constant dense<0.000000e+00> : vector<128x4xf32>
    %95 = tpu.matmul %94, %35, %cst_21 {dimension_numbers = #tpu.dot_dimension_numbers<[1], [0], [0], [1], [0, 0, 1, 1], [], []>} : vector<128x32xf32>, vector<32x4xf32>, vector<128x4xf32> -> vector<128x4xf32>
    %96 = vector.shape_cast %95 : vector<128x4xf32> to vector<2x8x8x4xf32>
    %97 = arith.addf %96, %22 : vector<2x8x8x4xf32>
    %98 = math.exp %97 : vector<2x8x8x4xf32>
    %cst_22 = arith.constant dense<0.000000e+00> : vector<2x8x4xf32>
    %99 = vector.multi_reduction <add>, %98, %cst_22 [2] : vector<2x8x8x4xf32> to vector<2x8x4xf32>
    %100 = vector.shape_cast %99 : vector<2x8x4xf32> to vector<2x8x1x4xf32>
    %101 = tpu.reciprocal %100 {approx = true} : vector<2x8x1x4xf32> -> vector<2x8x1x4xf32>
    %102 = vector.broadcast %101 : vector<2x8x1x4xf32> to vector<2x8x8x4xf32>
    %103 = arith.mulf %98, %102 : vector<2x8x8x4xf32>
    %104 = vector.shape_cast %103 : vector<2x8x8x4xf32> to vector<128x4xf32>
    %cst_23 = arith.constant dense<0.000000e+00> : vector<128x32xf32>
    %105 = tpu.matmul %104, %48, %cst_23 {dimension_numbers = #tpu.dot_dimension_numbers<[1], [0], [0], [1], [0, 0, 1, 1], [], []>} : vector<128x4xf32>, vector<4x32xf32>, vector<128x32xf32> -> vector<128x32xf32>
    %106 = vector.shape_cast %105 : vector<128x32xf32> to vector<2x8x8x32xf32>
    %107 = vector.shape_cast %88 : vector<2x8x32xf32> to vector<2x1x8x32xf32>
    %108 = vector.broadcast %107 : vector<2x1x8x32xf32> to vector<2x8x8x32xf32>
    %109 = arith.mulf %106, %108 : vector<2x8x8x32xf32>
    %cst_24 = arith.constant dense<0.000000e+00> : vector<2x8x32xf32>
    %110 = vector.multi_reduction <add>, %109, %cst_24 [2] : vector<2x8x8x32xf32> to vector<2x8x32xf32>
    %111 = vector.shape_cast %110 : vector<2x8x32xf32> to vector<16x32xf32>
    %c0_25 = arith.constant 0 : index
    %c0_26 = arith.constant 0 : index
    %c0_27 = arith.constant 0 : index
    %112 = vector.load %arg3[%c0_25, %c0_26, %c0_27] : memref<2x32x32xf32, #tpu.memory_space<vmem>>, vector<1x32x32xf32>
    %113 = vector.shape_cast %112 : vector<1x32x32xf32> to vector<32x32xf32>
    %cst_28 = arith.constant dense<0.000000e+00> : vector<16x32xf32>
    %114 = tpu.matmul %111, %113, %cst_28 {dimension_numbers = #tpu.dot_dimension_numbers<[1], [0], [0], [1], [0, 0, 1, 1], [], []>} : vector<16x32xf32>, vector<32x32xf32>, vector<16x32xf32> -> vector<16x32xf32>
    %115 = arith.addf %16, %114 : vector<16x32xf32>
    %116 = vector.broadcast %55 : vector<1x32xf32> to vector<16x32xf32>
    %117 = arith.addf %115, %116 : vector<16x32xf32>
    %cst_29 = arith.constant dense<0.000000e+00> : vector<16xf32>
    %118 = vector.multi_reduction <add>, %117, %cst_29 [1] : vector<16x32xf32> to vector<16xf32>
    %119 = vector.shape_cast %118 : vector<16xf32> to vector<16x1xf32>
    %cst_30 = arith.constant 3.200000e+01 : f32
    %120 = vector.broadcast %cst_30 : f32 to vector<16x1xf32>
    %121 = arith.divf %119, %120 : vector<16x1xf32>
    %122 = vector.broadcast %121 : vector<16x1xf32> to vector<16x32xf32>
    %123 = arith.subf %117, %122 : vector<16x32xf32>
    %124 = arith.mulf %123, %123 : vector<16x32xf32>
    %cst_31 = arith.constant dense<0.000000e+00> : vector<16xf32>
    %125 = vector.multi_reduction <add>, %124, %cst_31 [1] : vector<16x32xf32> to vector<16xf32>
    %126 = vector.shape_cast %125 : vector<16xf32> to vector<16x1xf32>
    %cst_32 = arith.constant 3.200000e+01 : f32
    %127 = vector.broadcast %cst_32 : f32 to vector<16x1xf32>
    %128 = arith.divf %126, %127 : vector<16x1xf32>
    %129 = vector.broadcast %121 : vector<16x1xf32> to vector<16x32xf32>
    %130 = arith.subf %117, %129 : vector<16x32xf32>
    %cst_33 = arith.constant 9.99999974E-6 : f32
    %131 = vector.broadcast %cst_33 : f32 to vector<16x1xf32>
    %132 = arith.addf %128, %131 : vector<16x1xf32>
    %133 = math.rsqrt %132 : vector<16x1xf32>
    %134 = vector.broadcast %133 : vector<16x1xf32> to vector<16x32xf32>
    %135 = arith.mulf %130, %134 : vector<16x32xf32>
    %136 = vector.broadcast %53 : vector<1x32xf32> to vector<16x32xf32>
    %137 = arith.mulf %135, %136 : vector<16x32xf32>
    %138 = vector.broadcast %54 : vector<1x32xf32> to vector<16x32xf32>
    %139 = arith.addf %137, %138 : vector<16x32xf32>
    %c0_34 = arith.constant 0 : index
    %c0_35 = arith.constant 0 : index
    %c0_36 = arith.constant 0 : index
    %140 = vector.load %arg4[%c0_34, %c0_35, %c0_36] : memref<2x32x128xf32, #tpu.memory_space<vmem>>, vector<1x32x128xf32>
    %141 = vector.shape_cast %140 : vector<1x32x128xf32> to vector<32x128xf32>
    %cst_37 = arith.constant dense<0.000000e+00> : vector<16x128xf32>
    %142 = tpu.matmul %139, %141, %cst_37 {dimension_numbers = #tpu.dot_dimension_numbers<[1], [0], [0], [1], [0, 0, 1, 1], [], []>} : vector<16x32xf32>, vector<32x128xf32>, vector<16x128xf32> -> vector<16x128xf32>
    %143 = vector.broadcast %57 : vector<1x128xf32> to vector<16x128xf32>
    %144 = arith.addf %142, %143 : vector<16x128xf32>
    %cst_38 = arith.constant 0.000000e+00 : f32
    %145 = vector.broadcast %cst_38 : f32 to vector<16x128xf32>
    %146 = arith.maximumf %144, %145 : vector<16x128xf32>
    %c0_39 = arith.constant 0 : index
    %c0_40 = arith.constant 0 : index
    %c0_41 = arith.constant 0 : index
    %147 = vector.load %arg5[%c0_39, %c0_40, %c0_41] : memref<2x128x32xf32, #tpu.memory_space<vmem>>, vector<1x128x32xf32>
    %148 = vector.shape_cast %147 : vector<1x128x32xf32> to vector<128x32xf32>
    %cst_42 = arith.constant dense<0.000000e+00> : vector<16x32xf32>
    %149 = tpu.matmul %146, %148, %cst_42 {dimension_numbers = #tpu.dot_dimension_numbers<[1], [0], [0], [1], [0, 0, 1, 1], [], []>} : vector<16x128xf32>, vector<128x32xf32>, vector<16x32xf32> -> vector<16x32xf32>
    %150 = arith.addf %117, %149 : vector<16x32xf32>
    %151 = vector.broadcast %56 : vector<1x32xf32> to vector<16x32xf32>
    %152 = arith.addf %150, %151 : vector<16x32xf32>
    %c1 = arith.constant 1 : index
    %c0_43 = arith.constant 0 : index
    %c0_44 = arith.constant 0 : index
    %153 = vector.load %arg6[%c1, %c0_43, %c0_44] : memref<2x8x128xf32, #tpu.memory_space<vmem>>, vector<1x8x128xf32>
    %154 = vector.shape_cast %153 : vector<1x8x128xf32> to vector<8x128xf32>
    %155 = vector.extract_strided_slice %154 {offsets = [0, 0], sizes = [1, 32], strides = [1, 1]} : vector<8x128xf32> to vector<1x32xf32>
    %156 = vector.extract_strided_slice %154 {offsets = [1, 0], sizes = [1, 32], strides = [1, 1]} : vector<8x128xf32> to vector<1x32xf32>
    %157 = vector.extract_strided_slice %154 {offsets = [2, 0], sizes = [1, 32], strides = [1, 1]} : vector<8x128xf32> to vector<1x32xf32>
    %158 = vector.extract_strided_slice %154 {offsets = [3, 0], sizes = [1, 32], strides = [1, 1]} : vector<8x128xf32> to vector<1x32xf32>
    %159 = vector.extract_strided_slice %154 {offsets = [4, 0], sizes = [1, 32], strides = [1, 1]} : vector<8x128xf32> to vector<1x32xf32>
    %160 = vector.extract_strided_slice %154 {offsets = [5, 0], sizes = [1, 32], strides = [1, 1]} : vector<8x128xf32> to vector<1x32xf32>
    %161 = vector.extract_strided_slice %154 {offsets = [6, 0], sizes = [1, 128], strides = [1, 1]} : vector<8x128xf32> to vector<1x128xf32>
    %cst_45 = arith.constant dense<0.000000e+00> : vector<16xf32>
    %162 = vector.multi_reduction <add>, %152, %cst_45 [1] : vector<16x32xf32> to vector<16xf32>
    %163 = vector.shape_cast %162 : vector<16xf32> to vector<16x1xf32>
    %cst_46 = arith.constant 3.200000e+01 : f32
    %164 = vector.broadcast %cst_46 : f32 to vector<16x1xf32>
    %165 = arith.divf %163, %164 : vector<16x1xf32>
    %166 = vector.broadcast %165 : vector<16x1xf32> to vector<16x32xf32>
    %167 = arith.subf %152, %166 : vector<16x32xf32>
    %168 = arith.mulf %167, %167 : vector<16x32xf32>
    %cst_47 = arith.constant dense<0.000000e+00> : vector<16xf32>
    %169 = vector.multi_reduction <add>, %168, %cst_47 [1] : vector<16x32xf32> to vector<16xf32>
    %170 = vector.shape_cast %169 : vector<16xf32> to vector<16x1xf32>
    %cst_48 = arith.constant 3.200000e+01 : f32
    %171 = vector.broadcast %cst_48 : f32 to vector<16x1xf32>
    %172 = arith.divf %170, %171 : vector<16x1xf32>
    %173 = vector.broadcast %165 : vector<16x1xf32> to vector<16x32xf32>
    %174 = arith.subf %152, %173 : vector<16x32xf32>
    %cst_49 = arith.constant 9.99999974E-6 : f32
    %175 = vector.broadcast %cst_49 : f32 to vector<16x1xf32>
    %176 = arith.addf %172, %175 : vector<16x1xf32>
    %177 = math.rsqrt %176 : vector<16x1xf32>
    %178 = vector.broadcast %177 : vector<16x1xf32> to vector<16x32xf32>
    %179 = arith.mulf %174, %178 : vector<16x32xf32>
    %180 = vector.broadcast %155 : vector<1x32xf32> to vector<16x32xf32>
    %181 = arith.mulf %179, %180 : vector<16x32xf32>
    %182 = vector.broadcast %156 : vector<1x32xf32> to vector<16x32xf32>
    %183 = arith.addf %181, %182 : vector<16x32xf32>
    %c1_50 = arith.constant 1 : index
    %c0_51 = arith.constant 0 : index
    %c0_52 = arith.constant 0 : index
    %184 = vector.load %arg2[%c1_50, %c0_51, %c0_52] : memref<2x32x96xf32, #tpu.memory_space<vmem>>, vector<1x32x96xf32>
    %185 = vector.shape_cast %184 : vector<1x32x96xf32> to vector<32x96xf32>
    %cst_53 = arith.constant dense<0.000000e+00> : vector<16x96xf32>
    %186 = tpu.matmul %183, %185, %cst_53 {dimension_numbers = #tpu.dot_dimension_numbers<[1], [0], [0], [1], [0, 0, 1, 1], [], []>} : vector<16x32xf32>, vector<32x96xf32>, vector<16x96xf32> -> vector<16x96xf32>
    %187 = vector.extract_strided_slice %186 {offsets = [0, 0], sizes = [16, 32], strides = [1, 1]} : vector<16x96xf32> to vector<16x32xf32>
    %188 = vector.shape_cast %187 : vector<16x32xf32> to vector<2x8x32xf32>
    %189 = vector.extract_strided_slice %186 {offsets = [0, 32], sizes = [16, 32], strides = [1, 1]} : vector<16x96xf32> to vector<16x32xf32>
    %190 = vector.shape_cast %189 : vector<16x32xf32> to vector<2x8x32xf32>
    %191 = vector.extract_strided_slice %186 {offsets = [0, 64], sizes = [16, 32], strides = [1, 1]} : vector<16x96xf32> to vector<16x32xf32>
    %192 = vector.shape_cast %191 : vector<16x32xf32> to vector<2x8x32xf32>
    %193 = vector.shape_cast %188 : vector<2x8x32xf32> to vector<2x8x1x32xf32>
    %194 = vector.shape_cast %190 : vector<2x8x32xf32> to vector<2x1x8x32xf32>
    %195 = vector.broadcast %193 : vector<2x8x1x32xf32> to vector<2x8x8x32xf32>
    %196 = vector.broadcast %194 : vector<2x1x8x32xf32> to vector<2x8x8x32xf32>
    %197 = arith.mulf %195, %196 : vector<2x8x8x32xf32>
    %198 = vector.shape_cast %197 : vector<2x8x8x32xf32> to vector<128x32xf32>
    %cst_54 = arith.constant dense<0.000000e+00> : vector<128x4xf32>
    %199 = tpu.matmul %198, %35, %cst_54 {dimension_numbers = #tpu.dot_dimension_numbers<[1], [0], [0], [1], [0, 0, 1, 1], [], []>} : vector<128x32xf32>, vector<32x4xf32>, vector<128x4xf32> -> vector<128x4xf32>
    %200 = vector.shape_cast %199 : vector<128x4xf32> to vector<2x8x8x4xf32>
    %201 = arith.addf %200, %22 : vector<2x8x8x4xf32>
    %202 = math.exp %201 : vector<2x8x8x4xf32>
    %cst_55 = arith.constant dense<0.000000e+00> : vector<2x8x4xf32>
    %203 = vector.multi_reduction <add>, %202, %cst_55 [2] : vector<2x8x8x4xf32> to vector<2x8x4xf32>
    %204 = vector.shape_cast %203 : vector<2x8x4xf32> to vector<2x8x1x4xf32>
    %205 = tpu.reciprocal %204 {approx = true} : vector<2x8x1x4xf32> -> vector<2x8x1x4xf32>
    %206 = vector.broadcast %205 : vector<2x8x1x4xf32> to vector<2x8x8x4xf32>
    %207 = arith.mulf %202, %206 : vector<2x8x8x4xf32>
    %208 = vector.shape_cast %207 : vector<2x8x8x4xf32> to vector<128x4xf32>
    %cst_56 = arith.constant dense<0.000000e+00> : vector<128x32xf32>
    %209 = tpu.matmul %208, %48, %cst_56 {dimension_numbers = #tpu.dot_dimension_numbers<[1], [0], [0], [1], [0, 0, 1, 1], [], []>} : vector<128x4xf32>, vector<4x32xf32>, vector<128x32xf32> -> vector<128x32xf32>
    %210 = vector.shape_cast %209 : vector<128x32xf32> to vector<2x8x8x32xf32>
    %211 = vector.shape_cast %192 : vector<2x8x32xf32> to vector<2x1x8x32xf32>
    %212 = vector.broadcast %211 : vector<2x1x8x32xf32> to vector<2x8x8x32xf32>
    %213 = arith.mulf %210, %212 : vector<2x8x8x32xf32>
    %cst_57 = arith.constant dense<0.000000e+00> : vector<2x8x32xf32>
    %214 = vector.multi_reduction <add>, %213, %cst_57 [2] : vector<2x8x8x32xf32> to vector<2x8x32xf32>
    %215 = vector.shape_cast %214 : vector<2x8x32xf32> to vector<16x32xf32>
    %c1_58 = arith.constant 1 : index
    %c0_59 = arith.constant 0 : index
    %c0_60 = arith.constant 0 : index
    %216 = vector.load %arg3[%c1_58, %c0_59, %c0_60] : memref<2x32x32xf32, #tpu.memory_space<vmem>>, vector<1x32x32xf32>
    %217 = vector.shape_cast %216 : vector<1x32x32xf32> to vector<32x32xf32>
    %cst_61 = arith.constant dense<0.000000e+00> : vector<16x32xf32>
    %218 = tpu.matmul %215, %217, %cst_61 {dimension_numbers = #tpu.dot_dimension_numbers<[1], [0], [0], [1], [0, 0, 1, 1], [], []>} : vector<16x32xf32>, vector<32x32xf32>, vector<16x32xf32> -> vector<16x32xf32>
    %219 = arith.addf %152, %218 : vector<16x32xf32>
    %220 = vector.broadcast %159 : vector<1x32xf32> to vector<16x32xf32>
    %221 = arith.addf %219, %220 : vector<16x32xf32>
    %cst_62 = arith.constant dense<0.000000e+00> : vector<16xf32>
    %222 = vector.multi_reduction <add>, %221, %cst_62 [1] : vector<16x32xf32> to vector<16xf32>
    %223 = vector.shape_cast %222 : vector<16xf32> to vector<16x1xf32>
    %cst_63 = arith.constant 3.200000e+01 : f32
    %224 = vector.broadcast %cst_63 : f32 to vector<16x1xf32>
    %225 = arith.divf %223, %224 : vector<16x1xf32>
    %226 = vector.broadcast %225 : vector<16x1xf32> to vector<16x32xf32>
    %227 = arith.subf %221, %226 : vector<16x32xf32>
    %228 = arith.mulf %227, %227 : vector<16x32xf32>
    %cst_64 = arith.constant dense<0.000000e+00> : vector<16xf32>
    %229 = vector.multi_reduction <add>, %228, %cst_64 [1] : vector<16x32xf32> to vector<16xf32>
    %230 = vector.shape_cast %229 : vector<16xf32> to vector<16x1xf32>
    %cst_65 = arith.constant 3.200000e+01 : f32
    %231 = vector.broadcast %cst_65 : f32 to vector<16x1xf32>
    %232 = arith.divf %230, %231 : vector<16x1xf32>
    %233 = vector.broadcast %225 : vector<16x1xf32> to vector<16x32xf32>
    %234 = arith.subf %221, %233 : vector<16x32xf32>
    %cst_66 = arith.constant 9.99999974E-6 : f32
    %235 = vector.broadcast %cst_66 : f32 to vector<16x1xf32>
    %236 = arith.addf %232, %235 : vector<16x1xf32>
    %237 = math.rsqrt %236 : vector<16x1xf32>
    %238 = vector.broadcast %237 : vector<16x1xf32> to vector<16x32xf32>
    %239 = arith.mulf %234, %238 : vector<16x32xf32>
    %240 = vector.broadcast %157 : vector<1x32xf32> to vector<16x32xf32>
    %241 = arith.mulf %239, %240 : vector<16x32xf32>
    %242 = vector.broadcast %158 : vector<1x32xf32> to vector<16x32xf32>
    %243 = arith.addf %241, %242 : vector<16x32xf32>
    %c1_67 = arith.constant 1 : index
    %c0_68 = arith.constant 0 : index
    %c0_69 = arith.constant 0 : index
    %244 = vector.load %arg4[%c1_67, %c0_68, %c0_69] : memref<2x32x128xf32, #tpu.memory_space<vmem>>, vector<1x32x128xf32>
    %245 = vector.shape_cast %244 : vector<1x32x128xf32> to vector<32x128xf32>
    %cst_70 = arith.constant dense<0.000000e+00> : vector<16x128xf32>
    %246 = tpu.matmul %243, %245, %cst_70 {dimension_numbers = #tpu.dot_dimension_numbers<[1], [0], [0], [1], [0, 0, 1, 1], [], []>} : vector<16x32xf32>, vector<32x128xf32>, vector<16x128xf32> -> vector<16x128xf32>
    %247 = vector.broadcast %161 : vector<1x128xf32> to vector<16x128xf32>
    %248 = arith.addf %246, %247 : vector<16x128xf32>
    %cst_71 = arith.constant 0.000000e+00 : f32
    %249 = vector.broadcast %cst_71 : f32 to vector<16x128xf32>
    %250 = arith.maximumf %248, %249 : vector<16x128xf32>
    %c1_72 = arith.constant 1 : index
    %c0_73 = arith.constant 0 : index
    %c0_74 = arith.constant 0 : index
    %251 = vector.load %arg5[%c1_72, %c0_73, %c0_74] : memref<2x128x32xf32, #tpu.memory_space<vmem>>, vector<1x128x32xf32>
    %252 = vector.shape_cast %251 : vector<1x128x32xf32> to vector<128x32xf32>
    %cst_75 = arith.constant dense<0.000000e+00> : vector<16x32xf32>
    %253 = tpu.matmul %250, %252, %cst_75 {dimension_numbers = #tpu.dot_dimension_numbers<[1], [0], [0], [1], [0, 0, 1, 1], [], []>} : vector<16x128xf32>, vector<128x32xf32>, vector<16x32xf32> -> vector<16x32xf32>
    %254 = arith.addf %221, %253 : vector<16x32xf32>
    %255 = vector.broadcast %160 : vector<1x32xf32> to vector<16x32xf32>
    %256 = arith.addf %254, %255 : vector<16x32xf32>
    %c0_76 = arith.constant 0 : index
    %c0_77 = arith.constant 0 : index
    %257 = vector.load %arg7[%c0_76, %c0_77] : memref<40x128xf32, #tpu.memory_space<vmem>>, vector<40x128xf32>
    %258 = vector.extract_strided_slice %257 {offsets = [0, 0], sizes = [32, 128], strides = [1, 1]} : vector<40x128xf32> to vector<32x128xf32>
    %cst_78 = arith.constant dense<0.000000e+00> : vector<16x128xf32>
    %259 = tpu.matmul %256, %258, %cst_78 {dimension_numbers = #tpu.dot_dimension_numbers<[1], [0], [0], [1], [0, 0, 1, 1], [], []>} : vector<16x32xf32>, vector<32x128xf32>, vector<16x128xf32> -> vector<16x128xf32>
    %260 = vector.extract_strided_slice %257 {offsets = [32, 0], sizes = [1, 128], strides = [1, 1]} : vector<40x128xf32> to vector<1x128xf32>
    %261 = vector.broadcast %260 : vector<1x128xf32> to vector<16x128xf32>
    %262 = arith.addf %259, %261 : vector<16x128xf32>
    %263 = vector.shape_cast %262 : vector<16x128xf32> to vector<2x8x128xf32>
    %c0_79 = arith.constant 0 : index
    %c0_80 = arith.constant 0 : index
    %c0_81 = arith.constant 0 : index
    %264 = vector.load %arg8[%c0_79, %c0_80, %c0_81] : memref<2x8x128xf32, #tpu.memory_space<vmem>>, vector<2x8x128xf32>
    tpu.vector_store %arg8[%c0_79, %c0_80, %c0_81], %263 {strides = array<i32>} : memref<2x8x128xf32, #tpu.memory_space<vmem>>, vector<2x8x128xf32>,
    %265 = tpu.iota {dimensions = array<i32: 1>} : vector<16x128xi32>
    %c65_i32 = arith.constant 65 : i32
    %266 = vector.broadcast %c65_i32 : i32 to vector<16x128xi32>
    %267 = arith.cmpi slt, %265, %266 : vector<16x128xi32>
    %cst_82 = arith.constant -1.000000e+30 : f32
    %268 = vector.broadcast %cst_82 : f32 to vector<16x128xf32>
    %269 = arith.select %267, %262, %268 : vector<16x128xi1>, vector<16x128xf32>
    %cst_83 = arith.constant dense<0xFF800000> : vector<16xf32>
    %270 = vector.multi_reduction <maximumf>, %269, %cst_83 [1] : vector<16x128xf32> to vector<16xf32>
    %271 = vector.shape_cast %270 : vector<16xf32> to vector<16x1xf32>
    %272 = vector.broadcast %271 : vector<16x1xf32> to vector<16x128xf32>
    %273 = arith.subf %269, %272 : vector<16x128xf32>
    %274 = math.exp %273 : vector<16x128xf32>
    %cst_84 = arith.constant dense<0.000000e+00> : vector<16xf32>
    %275 = vector.multi_reduction <add>, %274, %cst_84 [1] : vector<16x128xf32> to vector<16xf32>
    %276 = vector.shape_cast %275 : vector<16xf32> to vector<16x1xf32>
    %277 = math.log %276 : vector<16x1xf32>
    %278 = arith.addf %271, %277 : vector<16x1xf32>
    %279 = vector.broadcast %3 : vector<16x1xi32> to vector<16x128xi32>
    %280 = arith.cmpi eq, %265, %279 : vector<16x128xi32>
    %cst_85 = arith.constant 0.000000e+00 : f32
    %281 = vector.broadcast %cst_85 : f32 to vector<16x128xf32>
    %282 = arith.select %280, %262, %281 : vector<16x128xi1>, vector<16x128xf32>
    %cst_86 = arith.constant dense<0.000000e+00> : vector<16xf32>
    %283 = vector.multi_reduction <add>, %282, %cst_86 [1] : vector<16x128xf32> to vector<16xf32>
    %284 = vector.shape_cast %283 : vector<16xf32> to vector<16x1xf32>
    %285 = arith.subf %278, %284 : vector<16x1xf32>
    %286 = vector.shape_cast %285 : vector<16x1xf32> to vector<1x16x1xf32>
    %cst_87 = arith.constant dense<0.000000e+00> : vector<1xf32>
    %287 = vector.multi_reduction <add>, %286, %cst_87 [1, 2] : vector<1x16x1xf32> to vector<1xf32>
    %288 = vector.shape_cast %287 : vector<1xf32> to vector<1x1x1xf32>
    %289 = vector.extract %288[0, 0, 0] : f32 from vector<1x1x1xf32>
    %290 = vector.broadcast %289 : f32 to vector<1x1xf32>
    %cst_88 = arith.constant 1.600000e+01 : f32
    %291 = vector.broadcast %cst_88 : f32 to vector<1x1xf32>
    %292 = arith.divf %290, %291 : vector<1x1xf32>
    %c0_89 = arith.constant 0 : index
    %c0_90 = arith.constant 0 : index
    %293 = vector.load %arg9[%c0_89, %c0_90] : memref<1x1xf32, #tpu.memory_space<vmem>>, vector<1x1xf32>
    tpu.vector_store %arg9[%c0_89, %c0_90], %292 {strides = array<i32>} : memref<1x1xf32, #tpu.memory_space<vmem>>, vector<1x1xf32>,
    return
  }
}

</mosaic_0001>

<llo_original>
// kernel: tpu_custom_call.1
$region0: #{tpu_custom_call.1}
  #allocation0 [shape = 'u32[]', space=smem, size = 0x4, offset = 0x4, fixed_abs, tag = 'smem constant byte address 0x4 - core index']
  #allocation1 [shape = 'u32[72,128]{1,0:T(1,128)}', space=vmem, size = 0x9000, scoped, tag = 'internal scratch']
  %s0 = inlined_call_operand.vmem [shape: s32[16,2], index: 0, kind: input, shape index: {}]
  %s1 = inlined_call_operand.vmem [shape: f32[136,32], index: 1, kind: input, shape index: {}]
  %s2 = inlined_call_operand.vmem [shape: f32[2,32,96], index: 2, kind: input, shape index: {}]
  %s3 = inlined_call_operand.vmem [shape: f32[2,32,32], index: 3, kind: input, shape index: {}]
  %s4 = inlined_call_operand.vmem [shape: f32[2,32,128], index: 4, kind: input, shape index: {}]
  %s5 = inlined_call_operand.vmem [shape: f32[2,128,32], index: 5, kind: input, shape index: {}]
  %s6 = inlined_call_operand.vmem [shape: f32[2,8,128], index: 6, kind: input, shape index: {}]
  %s7 = inlined_call_operand.vmem [shape: f32[40,128], index: 7, kind: input, shape index: {}]
  %s8 = inlined_call_operand.hbm [shape: f32[2,8,128], index: 8, kind: output, shape index: {0}]
  %s9 = inlined_call_operand.hbm [shape: f32[1,1], index: 9, kind: output, shape index: {1}]
  %10 = xla_tuple %s8, %s9
  %s11 = sld [smem:[#allocation0]]
  $region50: #{tpu_custom_call.1} parent=0
    _
  %s13 = ssub.s32 1, %s11
  %s14 = scalar_select 0, %s13, %s11
  $region1: #{tpu_custom_call.1} parent=0
    #allocation2 [shape = 'u8[8192]{0}', space=vmem, size = 0x2000, scoped, tag = 'output window, operand 0, single buffered']
    #allocation3 [shape = 's32[1]{0}', space=sflag, size = 0x4, scoped, tag = 'scoped memory for tpu_custom_call.1']
    #allocation4 [shape = 'u8[512]{0}', space=vmem, size = 0x400, scoped, tag = 'output window, operand 1, single buffered']
    #allocation5 [shape = 's32[1]{0}', space=sflag, size = 0x4, scoped, tag = 'scoped memory for tpu_custom_call.1']
    %15 = vsyncpa [#allocation3], 0
    %16 = vsyncpa [#allocation5], 0
    // Predicated region
    $region2: #{tpu_custom_call.1} parent=1 // pred_check
      _
    $region3: #{tpu_custom_call.1} parent=1 // pred_check_branch
      %18 = sbr.rel (0) target = $region5
    $region4: #{tpu_custom_call.1} parent=1 // pred_region
      _
    $region5: #{tpu_custom_call.1} parent=1 // pred_fallthru
      _
    // Predicated region
    $region6: #{tpu_custom_call.1} parent=1 // pred_check
      _
    $region7: #{tpu_custom_call.1} parent=1 // pred_check_branch
      %20 = sbr.rel (0) target = $region9
    $region8: #{tpu_custom_call.1} parent=1 // pred_region
      _
    $region9: #{tpu_custom_call.1} parent=1 // pred_fallthru
      _
    // Predicated region
    $region10: #{tpu_custom_call.1} parent=1 // pred_check
      _
    $region11: #{tpu_custom_call.1} parent=1 // pred_check_branch
      %22 = sbr.rel (0) target = $region13
    $region12: #{tpu_custom_call.1} parent=1 // pred_region
      _
    $region13: #{tpu_custom_call.1} parent=1 // pred_fallthru
      _
    // Predicated region
    $region14: #{tpu_custom_call.1} parent=1 // pred_check
      _
    $region15: #{tpu_custom_call.1} parent=1 // pred_check_branch
      %24 = sbr.rel (0) target = $region17
    $region16: #{tpu_custom_call.1} parent=1 // pred_region
      _
    $region17: #{tpu_custom_call.1} parent=1 // pred_fallthru
      _
    // Predicated region
    $region18: #{tpu_custom_call.1} parent=1 // pred_check
      _
    $region19: #{tpu_custom_call.1} parent=1 // pred_check_branch
      %26 = sbr.rel (0) target = $region21
    $region20: #{tpu_custom_call.1} parent=1 // pred_region
      _
    $region21: #{tpu_custom_call.1} parent=1 // pred_fallthru
      _
    // Predicated region
    $region22: #{tpu_custom_call.1} parent=1 // pred_check
      _
    $region23: #{tpu_custom_call.1} parent=1 // pred_check_branch
      %28 = sbr.rel (0) target = $region25
    $region24: #{tpu_custom_call.1} parent=1 // pred_region
      _
    $region25: #{tpu_custom_call.1} parent=1 // pred_fallthru
      _
    // Predicated region
    $region26: #{tpu_custom_call.1} parent=1 // pred_check
      _
    $region27: #{tpu_custom_call.1} parent=1 // pred_check_branch
      %30 = sbr.rel (0) target = $region29
    $region28: #{tpu_custom_call.1} parent=1 // pred_region
      _
    $region29: #{tpu_custom_call.1} parent=1 // pred_fallthru
      _
    // Predicated region
    $region30: #{tpu_custom_call.1} parent=1 // pred_check
      _
    $region31: #{tpu_custom_call.1} parent=1 // pred_check_branch
      %32 = sbr.rel (0) target = $region33
    $region32: #{tpu_custom_call.1} parent=1 // pred_region
      _
    $region33: #{tpu_custom_call.1} parent=1 // pred_fallthru
      _
    %v33 = vld [vmem:[%s0] sm:$0xff]
    %v34 = vld [vmem:[%s0 + $0x8] sm:$0xff]
    %v35 = vlaneseq
    %v36 = vand.u32 %v35, 127
    %v37 = vadd.s32 %v36, 128
    %v38 = vlaneseq
    %v39 = vshrl.u32 %v38, 7
    %40 = vset.pattern.permute.xlu0 0
    %41 = vperm.xlu0 %40, %v33
    %v42 = vpop.permute.xlu0 %41
    %43 = vset.pattern.permute.xlu0 0
    %44 = vperm.xlu0 %43, %v34
    %v45 = vpop.permute.xlu0 %44
    %vm46 = vcmp.eq.s32.totalorder %v36, %v42
    %vm47 = vcmp.eq.s32.totalorder %v37, %v42
    %vm48 = vcmp.eq.s32.totalorder %v36, %v45
    %vm49 = vcmp.eq.s32.totalorder %v37, %v45
    %v50 = vadd.s32 %v39, 128
    %vm51 = vcmp.eq.s32.totalorder %v36, %v50
    %vm52 = vcmp.eq.s32.totalorder %v37, %v50
    %vm53 = vmor %vm46, %vm51
    %vm54 = vmor %vm47, %vm52
    %vm55 = vmor %vm48, %vm51
    %vm56 = vmor %vm49, %vm52
    %v57 = vsel %vm53, 1, 0
    %v58 = vsel %vm54, 1, 0
    %v59 = vsel %vm55, 1, 0
    %v60 = vsel %vm56, 1, 0
    %v61 = vcvt.s32.f32 %v57
    %v62 = vcvt.s32.f32 %v58
    %v63 = vcvt.s32.f32 %v59
    %v64 = vcvt.s32.f32 %v60
    %v65 = vld [vmem:[%s1] sm:$0xff]
    %v66 = vld [vmem:[%s1 + $0x8] sm:$0xff]
    %v67 = vld [vmem:[%s1 + $0x10] sm:$0xff]
    %v68 = vld [vmem:[%s1 + $0x18] sm:$0xff]
    %v69 = vld [vmem:[%s1 + $0x20] sm:$0xff]
    %v70 = vld [vmem:[%s1 + $0x28] sm:$0xff]
    %v71 = vld [vmem:[%s1 + $0x30] sm:$0xff]
    %v72 = vld [vmem:[%s1 + $0x38] sm:$0xff]
    %v73 = vld [vmem:[%s1 + $0x40] sm:$0xff]
    %v74 = vld [vmem:[%s1 + $0x48] sm:$0xff]
    %v75 = vld [vmem:[%s1 + $0x50] sm:$0xff]
    %v76 = vld [vmem:[%s1 + $0x58] sm:$0xff]
    %v77 = vld [vmem:[%s1 + $0x60] sm:$0xff]
    %v78 = vld [vmem:[%s1 + $0x68] sm:$0xff]
    %v79 = vld [vmem:[%s1 + $0x70] sm:$0xff]
    %v80 = vld [vmem:[%s1 + $0x78] sm:$0xff]
    %v81 = vld [vmem:[%s1 + $0x80] sm:$0xff]
    %vm82 = vcmask 64512
    %v84 = vsel %vm82, %v62, 0
    %v87 = vsel %vm82, %v64, 0
    %89 = vmatpush.msra.mxu0 %v80
    %90 = vmatpush.msra.mxu0 %v79
    %91 = vmatpush.msra.mxu0 %v78
    %92 = vmatpush.msra.mxu0 %v77
    %93 = vmatpush.msra.mxu0 %v76
    %94 = vmatpush.msra.mxu0 %v75
    %95 = vmatpush.msra.mxu0 %v74
    %96 = vmatpush.msra.mxu0 %v73
    %97 = vmatpush.msra.mxu0 %v72
    %98 = vmatpush.msra.mxu0 %v71
    %99 = vmatpush.msra.mxu0 %v70
    %100 = vmatpush.msra.mxu0 %v69
    %101 = vmatpush.msra.mxu0 %v68
    %102 = vmatpush.msra.mxu0 %v67
    %103 = vmatpush.msra.mxu0 %v66
    %104 = vmatpush.msra.mxu0 %v65
    %105 = vmatmul.f32.gmra.mxu0 %v61
    %v106 = vpop.f32.mrf.mxu0
    %v107 = vadd.f32 0.0, %v106
    %108 = vmatmul.f32.gmra.mxu0 %v63
    %v109 = vpop.f32.mrf.mxu0
    %v110 = vadd.f32 0.0, %v109
    %111 = vdwg.mxu0
    %112 = vmatpush.msra.mxu0 0.0
    %113 = vmatpush.msra.mxu0 0.0
    %114 = vmatpush.msra.mxu0 0.0
    %115 = vmatpush.msra.mxu0 0.0
    %116 = vmatpush.msra.mxu0 0.0
    %117 = vmatpush.msra.mxu0 0.0
    %118 = vmatpush.msra.mxu0 0.0
    %119 = vmatpush.msra.mxu0 0.0
    %120 = vmatpush.msra.mxu0 0.0
    %121 = vmatpush.msra.mxu0 0.0
    %122 = vmatpush.msra.mxu0 0.0
    %123 = vmatpush.msra.mxu0 0.0
    %124 = vmatpush.msra.mxu0 0.0
    %125 = vmatpush.msra.mxu0 0.0
    %126 = vmatpush.msra.mxu0 0.0
    %127 = vmatpush.msra.mxu0 %v81
    %128 = vmatmul.f32.gmra.mxu0 %v84
    %v129 = vpop.f32.mrf.mxu0
    %v130 = vadd.f32 %v107, %v129
    %131 = vmatmul.f32.gmra.mxu0 %v87
    %v132 = vpop.f32.mrf.mxu0
    %v133 = vadd.f32 %v110, %v132
    %134 = vdwg.mxu0
    %vm135 = vcmp.le.s32.totalorder %v39, 0
    %vm136 = vcmp.le.s32.totalorder %v39, 1
    %vm137 = vcmp.le.s32.totalorder %v39, 2
    %vm138 = vcmp.le.s32.totalorder %v39, 3
    %vm139 = vcmp.le.s32.totalorder %v39, 4
    %vm140 = vcmp.le.s32.totalorder %v39, 5
    %vm141 = vcmp.le.s32.totalorder %v39, 6
    %vm142 = vcmp.le.s32.totalorder %v39, 7
    %v143 = vsel %vm135, 0.0, -1e+30
    %v144 = vsel %vm136, 0.0, -1e+30
    %v145 = vsel %vm137, 0.0, -1e+30
    %v146 = vsel %vm138, 0.0, -1e+30
    %v147 = vsel %vm139, 0.0, -1e+30
    %v148 = vsel %vm140, 0.0, -1e+30
    %v149 = vsel %vm141, 0.0, -1e+30
    %v150 = vsel %vm142, 0.0, -1e+30
    %v151 = vadd.s32 %v39, 8
    %v152 = vadd.s32 %v39, 16
    %v153 = vadd.s32 %v39, 24
    %v154 = vmul.u32 %v36, 8
    %vm155 = vcmp.ge.s32.totalorder %v39, %v154
    %vm156 = vcmp.ge.s32.totalorder %v151, %v154
    %vm157 = vcmp.ge.s32.totalorder %v152, %v154
    %vm158 = vcmp.ge.s32.totalorder %v153, %v154
    %v159 = vadd.s32 %v36, 1
    %v160 = vmul.u32 %v159, 8
    %vm161 = vcmp.lt.s32.totalorder %v39, %v160
    %vm162 = vcmp.lt.s32.totalorder %v151, %v160
    %vm163 = vcmp.lt.s32.totalorder %v152, %v160
    %vm164 = vcmp.lt.s32.totalorder %v153, %v160
    %vm165 = vmand %vm155, %vm161
    %vm166 = vmand %vm156, %vm162
    %vm167 = vmand %vm157, %vm163
    %vm168 = vmand %vm158, %vm164
    %v169 = vsel %vm165, 1, 0
    %v170 = vsel %vm166, 1, 0
    %v171 = vsel %vm167, 1, 0
    %v172 = vsel %vm168, 1, 0
    %v173 = vcvt.s32.f32 %v169
    %v174 = vcvt.s32.f32 %v170
    %v175 = vcvt.s32.f32 %v171
    %v176 = vcvt.s32.f32 %v172
    %v177 = vmul.u32 %v39, 8
    %vm178 = vcmp.ge.s32.totalorder %v36, %v177
    %v179 = vadd.s32 %v39, 1
    %v180 = vmul.u32 %v179, 8
    %vm181 = vcmp.lt.s32.totalorder %v36, %v180
    %vm182 = vmand %vm178, %vm181
    %v183 = vsel %vm182, 1, 0
    %v184 = vcvt.s32.f32 %v183
    %v185 = vld [vmem:[%s6] sm:$0xff]
    %vm186 = vcmask 261120
    %v187 = vsel %vm186, %v130, 0.0
    %188 = vadd.xlane.f32.xlu0 %v187
    %v189 = vpop.xlane.xlu0 %188
    %v190 = vsel %vm186, %v133, 0.0
    %191 = vadd.xlane.f32.xlu0 %v190
    %v192 = vpop.xlane.xlu0 %191
    %v193 = vrcp.pop 32.0
    %v194 = vmul.f32 32.0, %v193
    %v195 = vsub.f32 1.0, %v194
    %v196 = vmul.f32 %v193, %v195
    %v197 = vadd.f32 %v193, %v196
    %vm198 = vweird.f32 %v193
    %v199 = vsel %vm198, %v193, %v197
    %v200 = vmul.f32 %v189, %v199
    %v201 = vmul.f32 %v192, %v199
    %v202 = vsub.f32 %v130, %v200
    %v203 = vsub.f32 %v133, %v201
    %v204 = vmul.f32 %v202, %v202
    %v205 = vmul.f32 %v203, %v203
    %v206 = vsel %vm186, %v204, 0.0
    %207 = vadd.xlane.f32.xlu0 %v206
    %v208 = vpop.xlane.xlu0 %207
    %v209 = vsel %vm186, %v205, 0.0
    %210 = vadd.xlane.f32.xlu0 %v209
    %v211 = vpop.xlane.xlu0 %210
    %v212 = vmul.f32 %v208, %v199
    %v213 = vmul.f32 %v211, %v199
    %v214 = vadd.f32 %v212, 1e-05
    %v215 = vadd.f32 %v213, 1e-05
    %v216 = vrsqrt.pop %v214
    %v217 = vmul.f32 %v216, %v214
    %v218 = vmul.f32 %v217, %v216
    %v219 = vmul.f32 0.5, %v218
    %v220 = vsub.f32 1.5, %v219
    %v221 = vmul.f32 %v216, %v220
    %vm222 = vweird.f32 %v214
    %vm223 = vweird.f32 %v216
    %vm224 = vmor %vm222, %vm223
    %v225 = vsel %vm224, %v216, %v221
    %v226 = vrsqrt.pop %v215
    %v227 = vmul.f32 %v226, %v215
    %v228 = vmul.f32 %v227, %v226
    %v229 = vmul.f32 0.5, %v228
    %v230 = vsub.f32 1.5, %v229
    %v231 = vmul.f32 %v226, %v230
    %vm232 = vweird.f32 %v215
    %vm233 = vweird.f32 %v226
    %vm234 = vmor %vm232, %vm233
    %v235 = vsel %vm234, %v226, %v231
    %v236 = vmul.f32 %v202, %v225
    %v237 = vmul.f32 %v203, %v235
    %v238 = vperm.slane %v185, 0
    %v239 = vmul.f32 %v236, %v238
    %v240 = vmul.f32 %v237, %v238
    %v241 = vperm.slane %v185, 1
    %v242 = vadd.f32 %v239, %v241
    %v243 = vadd.f32 %v240, %v241
    %v244 = vld [vmem:[%s2] sm:$0xff]
    %v245 = vld [vmem:[%s2 + $0x8] sm:$0xff]
    %v246 = vld [vmem:[%s2 + $0x10] sm:$0xff]
    %v247 = vld [vmem:[%s2 + $0x18] sm:$0xff]
    %v249 = vsel %vm186, %v242, 0
    %v252 = vsel %vm186, %v243, 0
    %254 = vmatpush.msra.mxu0 0.0
    %255 = vmatpush.msra.mxu0 0.0
    %256 = vmatpush.msra.mxu0 0.0
    %257 = vmatpush.msra.mxu0 0.0
    %258 = vmatpush.msra.mxu0 0.0
    %259 = vmatpush.msra.mxu0 0.0
    %260 = vmatpush.msra.mxu0 0.0
    %261 = vmatpush.msra.mxu0 0.0
    %262 = vmatpush.msra.mxu0 0.0
    %263 = vmatpush.msra.mxu0 0.0
    %264 = vmatpush.msra.mxu0 0.0
    %265 = vmatpush.msra.mxu0 0.0
    %266 = vmatpush.msra.mxu0 %v247
    %267 = vmatpush.msra.mxu0 %v246
    %268 = vmatpush.msra.mxu0 %v245
    %269 = vmatpush.msra.mxu0 %v244
    %270 = vmatmul.f32.gmra.mxu0 %v249
    %v271 = vpop.f32.mrf.mxu0
    %v272 = vadd.f32 0.0, %v271
    %273 = vmatmul.f32.gmra.mxu0 %v252
    %v274 = vpop.f32.mrf.mxu0
    %v275 = vadd.f32 0.0, %v274
    %276 = vdwg.mxu0
    %v279 = vrot.slane %v272, 1
    %v280 = vrot.slane %v272, 2
    %v281 = vrot.slane %v272, 3
    %v282 = vrot.slane %v272, 4
    %v283 = vrot.slane %v272, 5
    %v284 = vrot.slane %v272, 6
    %v285 = vrot.slane %v272, 7
    %v286 = vrot.slane %v275, 1
    %v287 = vrot.slane %v275, 2
    %v288 = vrot.slane %v275, 3
    %v289 = vrot.slane %v275, 4
    %v290 = vrot.slane %v275, 5
    %v291 = vrot.slane %v275, 6
    %v292 = vrot.slane %v275, 7
    %v293 = vperm.slane %v272, 0
    %v294 = vperm.slane %v279, 0
    %v295 = vperm.slane %v280, 0
    %v296 = vperm.slane %v281, 0
    %v297 = vperm.slane %v282, 0
    %v298 = vperm.slane %v283, 0
    %v299 = vperm.slane %v284, 0
    %v300 = vperm.slane %v285, 0
    %v301 = vperm.slane %v275, 0
    %v302 = vperm.slane %v286, 0
    %v303 = vperm.slane %v287, 0
    %v304 = vperm.slane %v288, 0
    %v305 = vperm.slane %v289, 0
    %v306 = vperm.slane %v290, 0
    %v307 = vperm.slane %v291, 0
    %v308 = vperm.slane %v292, 0
    %325 = vrot.lane.b32.xlu0 %v272, 96
    %v326 = vpop.permute.xlu0 %325
    %327 = vrot.lane.b32.xlu0 %v275, 96
    %v328 = vpop.permute.xlu0 %327
    %v331 = vmul.f32 %v293, %v326
    %v332 = vmul.f32 %v294, %v326
    %v333 = vmul.f32 %v295, %v326
    %v334 = vmul.f32 %v296, %v326
    %v335 = vmul.f32 %v297, %v326
    %v336 = vmul.f32 %v298, %v326
    %v337 = vmul.f32 %v299, %v326
    %v338 = vmul.f32 %v300, %v326
    %v339 = vmul.f32 %v301, %v328
    %v340 = vmul.f32 %v302, %v328
    %v341 = vmul.f32 %v303, %v328
    %v342 = vmul.f32 %v304, %v328
    %v343 = vmul.f32 %v305, %v328
    %v344 = vmul.f32 %v306, %v328
    %v345 = vmul.f32 %v307, %v328
    %v346 = vmul.f32 %v308, %v328
    %v348 = vsel %vm186, %v331, 0
    %v351 = vsel %vm186, %v332, 0
    %v354 = vsel %vm186, %v333, 0
    %v357 = vsel %vm186, %v334, 0
    %v360 = vsel %vm186, %v335, 0
    %v363 = vsel %vm186, %v336, 0
    %v366 = vsel %vm186, %v337, 0
    %v369 = vsel %vm186, %v338, 0
    %v372 = vsel %vm186, %v339, 0
    %v375 = vsel %vm186, %v340, 0
    %v378 = vsel %vm186, %v341, 0
    %v381 = vsel %vm186, %v342, 0
    %v384 = vsel %vm186, %v343, 0
    %v387 = vsel %vm186, %v344, 0
    %v390 = vsel %vm186, %v345, 0
    %v393 = vsel %vm186, %v346, 0
    %395 = vmatpush.msra.mxu0 0.0
    %396 = vmatpush.msra.mxu0 0.0
    %397 = vmatpush.msra.mxu0 0.0
    %398 = vmatpush.msra.mxu0 0.0
    %399 = vmatpush.msra.mxu0 0.0
    %400 = vmatpush.msra.mxu0 0.0
    %401 = vmatpush.msra.mxu0 0.0
    %402 = vmatpush.msra.mxu0 0.0
    %403 = vmatpush.msra.mxu0 0.0
    %404 = vmatpush.msra.mxu0 0.0
    %405 = vmatpush.msra.mxu0 0.0
    %406 = vmatpush.msra.mxu0 0.0
    %407 = vmatpush.msra.mxu0 %v176
    %408 = vmatpush.msra.mxu0 %v175
    %409 = vmatpush.msra.mxu0 %v174
    %410 = vmatpush.msra.mxu0 %v173
    %411 = vmatmul.f32.gmra.mxu0 %v348
    %v412 = vpop.f32.mrf.mxu0
    %v413 = vadd.f32 0.0, %v412
    %414 = vmatmul.f32.gmra.mxu0 %v351
    %v415 = vpop.f32.mrf.mxu0
    %v416 = vadd.f32 0.0, %v415
    %417 = vmatmul.f32.gmra.mxu0 %v354
    %v418 = vpop.f32.mrf.mxu0
    %v419 = vadd.f32 0.0, %v418
    %420 = vmatmul.f32.gmra.mxu0 %v357
    %v421 = vpop.f32.mrf.mxu0
    %v422 = vadd.f32 0.0, %v421
    %423 = vmatmul.f32.gmra.mxu0 %v360
    %v424 = vpop.f32.mrf.mxu0
    %v425 = vadd.f32 0.0, %v424
    %426 = vmatmul.f32.gmra.mxu0 %v363
    %v427 = vpop.f32.mrf.mxu0
    %v428 = vadd.f32 0.0, %v427
    %429 = vmatmul.f32.gmra.mxu0 %v366
    %v430 = vpop.f32.mrf.mxu0
    %v431 = vadd.f32 0.0, %v430
    %432 = vmatmul.f32.gmra.mxu0 %v369
    %v433 = vpop.f32.mrf.mxu0
    %v434 = vadd.f32 0.0, %v433
    %435 = vmatmul.f32.gmra.mxu0 %v372
    %v436 = vpop.f32.mrf.mxu0
    %v437 = vadd.f32 0.0, %v436
    %438 = vmatmul.f32.gmra.mxu0 %v375
    %v439 = vpop.f32.mrf.mxu0
    %v440 = vadd.f32 0.0, %v439
    %441 = vmatmul.f32.gmra.mxu0 %v378
    %v442 = vpop.f32.mrf.mxu0
    %v443 = vadd.f32 0.0, %v442
    %444 = vmatmul.f32.gmra.mxu0 %v381
    %v445 = vpop.f32.mrf.mxu0
    %v446 = vadd.f32 0.0, %v445
    %447 = vmatmul.f32.gmra.mxu0 %v384
    %v448 = vpop.f32.mrf.mxu0
    %v449 = vadd.f32 0.0, %v448
    %450 = vmatmul.f32.gmra.mxu0 %v387
    %v451 = vpop.f32.mrf.mxu0
    %v452 = vadd.f32 0.0, %v451
    %453 = vmatmul.f32.gmra.mxu0 %v390
    %v454 = vpop.f32.mrf.mxu0
    %v455 = vadd.f32 0.0, %v454
    %456 = vmatmul.f32.gmra.mxu0 %v393
    %v457 = vpop.f32.mrf.mxu0
    %v458 = vadd.f32 0.0, %v457
    %459 = vdwg.mxu0
    %v460 = vadd.f32 %v413, %v143
    %v461 = vadd.f32 %v416, %v144
    %v462 = vadd.f32 %v419, %v145
    %v463 = vadd.f32 %v422, %v146
    %v464 = vadd.f32 %v425, %v147
    %v465 = vadd.f32 %v428, %v148
    %v466 = vadd.f32 %v431, %v149
    %v467 = vadd.f32 %v434, %v150
    %v468 = vadd.f32 %v437, %v143
    %v469 = vadd.f32 %v440, %v144
    %v470 = vadd.f32 %v443, %v145
    %v471 = vadd.f32 %v446, %v146
    %v472 = vadd.f32 %v449, %v147
    %v473 = vadd.f32 %v452, %v148
    %v474 = vadd.f32 %v455, %v149
    %v475 = vadd.f32 %v458, %v150
    %v476 = vmul.f32 %v460, 1.442695
    %v477 = vpow.pop %v476
    %v478 = vmul.f32 %v461, 1.442695
    %v479 = vpow.pop %v478
    %v480 = vmul.f32 %v462, 1.442695
    %v481 = vpow.pop %v480
    %v482 = vmul.f32 %v463, 1.442695
    %v483 = vpow.pop %v482
    %v484 = vmul.f32 %v464, 1.442695
    %v485 = vpow.pop %v484
    %v486 = vmul.f32 %v465, 1.442695
    %v487 = vpow.pop %v486
    %v488 = vmul.f32 %v466, 1.442695
    %v489 = vpow.pop %v488
    %v490 = vmul.f32 %v467, 1.442695
    %v491 = vpow.pop %v490
    %v492 = vmul.f32 %v468, 1.442695
    %v493 = vpow.pop %v492
    %v494 = vmul.f32 %v469, 1.442695
    %v495 = vpow.pop %v494
    %v496 = vmul.f32 %v470, 1.442695
    %v497 = vpow.pop %v496
    %v498 = vmul.f32 %v471, 1.442695
    %v499 = vpow.pop %v498
    %v500 = vmul.f32 %v472, 1.442695
    %v501 = vpow.pop %v500
    %v502 = vmul.f32 %v473, 1.442695
    %v503 = vpow.pop %v502
    %v504 = vmul.f32 %v474, 1.442695
    %v505 = vpow.pop %v504
    %v506 = vmul.f32 %v475, 1.442695
    %v507 = vpow.pop %v506
    %vm508 = vcmask 31744
    %v509 = vsel %vm508, %v477, 0.0
    %v510 = vrot.slane %v509, 4
    %v511 = vadd.f32 %v509, %v510
    %v512 = vrot.slane %v511, 2
    %v513 = vadd.f32 %v511, %v512
    %v514 = vrot.slane %v513, 1
    %v515 = vadd.f32 %v513, %v514
    %v516 = vsel %vm508, %v479, 0.0
    %v517 = vrot.slane %v516, 4
    %v518 = vadd.f32 %v516, %v517
    %v519 = vrot.slane %v518, 2
    %v520 = vadd.f32 %v518, %v519
    %v521 = vrot.slane %v520, 1
    %v522 = vadd.f32 %v520, %v521
    %v523 = vsel %vm508, %v481, 0.0
    %v524 = vrot.slane %v523, 4
    %v525 = vadd.f32 %v523, %v524
    %v526 = vrot.slane %v525, 2
    %v527 = vadd.f32 %v525, %v526
    %v528 = vrot.slane %v527, 1
    %v529 = vadd.f32 %v527, %v528
    %v530 = vsel %vm508, %v483, 0.0
    %v531 = vrot.slane %v530, 4
    %v532 = vadd.f32 %v530, %v531
    %v533 = vrot.slane %v532, 2
    %v534 = vadd.f32 %v532, %v533
    %v535 = vrot.slane %v534, 1
    %v536 = vadd.f32 %v534, %v535
    %v537 = vsel %vm508, %v485, 0.0
    %v538 = vrot.slane %v537, 4
    %v539 = vadd.f32 %v537, %v538
    %v540 = vrot.slane %v539, 2
    %v541 = vadd.f32 %v539, %v540
    %v542 = vrot.slane %v541, 1
    %v543 = vadd.f32 %v541, %v542
    %v544 = vsel %vm508, %v487, 0.0
    %v545 = vrot.slane %v544, 4
    %v546 = vadd.f32 %v544, %v545
    %v547 = vrot.slane %v546, 2
    %v548 = vadd.f32 %v546, %v547
    %v549 = vrot.slane %v548, 1
    %v550 = vadd.f32 %v548, %v549
    %v551 = vsel %vm508, %v489, 0.0
    %v552 = vrot.slane %v551, 4
    %v553 = vadd.f32 %v551, %v552
    %v554 = vrot.slane %v553, 2
    %v555 = vadd.f32 %v553, %v554
    %v556 = vrot.slane %v555, 1
    %v557 = vadd.f32 %v555, %v556
    %v558 = vsel %vm508, %v491, 0.0
    %v559 = vrot.slane %v558, 4
    %v560 = vadd.f32 %v558, %v559
    %v561 = vrot.slane %v560, 2
    %v562 = vadd.f32 %v560, %v561
    %v563 = vrot.slane %v562, 1
    %v564 = vadd.f32 %v562, %v563
    %v565 = vsel %vm508, %v493, 0.0
    %v566 = vrot.slane %v565, 4
    %v567 = vadd.f32 %v565, %v566
    %v568 = vrot.slane %v567, 2
    %v569 = vadd.f32 %v567, %v568
    %v570 = vrot.slane %v569, 1
    %v571 = vadd.f32 %v569, %v570
    %v572 = vsel %vm508, %v495, 0.0
    %v573 = vrot.slane %v572, 4
    %v574 = vadd.f32 %v572, %v573
    %v575 = vrot.slane %v574, 2
    %v576 = vadd.f32 %v574, %v575
    %v577 = vrot.slane %v576, 1
    %v578 = vadd.f32 %v576, %v577
    %v579 = vsel %vm508, %v497, 0.0
    %v580 = vrot.slane %v579, 4
    %v581 = vadd.f32 %v579, %v580
    %v582 = vrot.slane %v581, 2
    %v583 = vadd.f32 %v581, %v582
    %v584 = vrot.slane %v583, 1
    %v585 = vadd.f32 %v583, %v584
    %v586 = vsel %vm508, %v499, 0.0
    %v587 = vrot.slane %v586, 4
    %v588 = vadd.f32 %v586, %v587
    %v589 = vrot.slane %v588, 2
    %v590 = vadd.f32 %v588, %v589
    %v591 = vrot.slane %v590, 1
    %v592 = vadd.f32 %v590, %v591
    %v593 = vsel %vm508, %v501, 0.0
    %v594 = vrot.slane %v593, 4
    %v595 = vadd.f32 %v593, %v594
    %v596 = vrot.slane %v595, 2
    %v597 = vadd.f32 %v595, %v596
    %v598 = vrot.slane %v597, 1
    %v599 = vadd.f32 %v597, %v598
    %v600 = vsel %vm508, %v503, 0.0
    %v601 = vrot.slane %v600, 4
    %v602 = vadd.f32 %v600, %v601
    %v603 = vrot.slane %v602, 2
    %v604 = vadd.f32 %v602, %v603
    %v605 = vrot.slane %v604, 1
    %v606 = vadd.f32 %v604, %v605
    %v607 = vsel %vm508, %v505, 0.0
    %v608 = vrot.slane %v607, 4
    %v609 = vadd.f32 %v607, %v608
    %v610 = vrot.slane %v609, 2
    %v611 = vadd.f32 %v609, %v610
    %v612 = vrot.slane %v611, 1
    %v613 = vadd.f32 %v611, %v612
    %v614 = vsel %vm508, %v507, 0.0
    %v615 = vrot.slane %v614, 4
    %v616 = vadd.f32 %v614, %v615
    %v617 = vrot.slane %v616, 2
    %v618 = vadd.f32 %v616, %v617
    %v619 = vrot.slane %v618, 1
    %v620 = vadd.f32 %v618, %v619
    %v621 = vrcp.pop %v515
    %v622 = vrcp.pop %v522
    %v623 = vrcp.pop %v529
    %v624 = vrcp.pop %v536
    %v625 = vrcp.pop %v543
    %v626 = vrcp.pop %v550
    %v627 = vrcp.pop %v557
    %v628 = vrcp.pop %v564
    %v629 = vrcp.pop %v571
    %v630 = vrcp.pop %v578
    %v631 = vrcp.pop %v585
    %v632 = vrcp.pop %v592
    %v633 = vrcp.pop %v599
    %v634 = vrcp.pop %v606
    %v635 = vrcp.pop %v613
    %v636 = vrcp.pop %v620
    %v637 = vmul.f32 %v477, %v621
    %v638 = vmul.f32 %v479, %v622
    %v639 = vmul.f32 %v481, %v623
    %v640 = vmul.f32 %v483, %v624
    %v641 = vmul.f32 %v485, %v625
    %v642 = vmul.f32 %v487, %v626
    %v643 = vmul.f32 %v489, %v627
    %v644 = vmul.f32 %v491, %v628
    %v645 = vmul.f32 %v493, %v629
    %v646 = vmul.f32 %v495, %v630
    %v647 = vmul.f32 %v497, %v631
    %v648 = vmul.f32 %v499, %v632
    %v649 = vmul.f32 %v501, %v633
    %v650 = vmul.f32 %v503, %v634
    %v651 = vmul.f32 %v505, %v635
    %v652 = vmul.f32 %v507, %v636
    %v654 = vsel %vm508, %v637, 0
    %v657 = vsel %vm508, %v638, 0
    %v660 = vsel %vm508, %v639, 0
    %v663 = vsel %vm508, %v640, 0
    %v666 = vsel %vm508, %v641, 0
    %v669 = vsel %vm508, %v642, 0
    %v672 = vsel %vm508, %v643, 0
    %v675 = vsel %vm508, %v644, 0
    %v678 = vsel %vm508, %v645, 0
    %v681 = vsel %vm508, %v646, 0
    %v684 = vsel %vm508, %v647, 0
    %v687 = vsel %vm508, %v648, 0
    %v690 = vsel %vm508, %v649, 0
    %v693 = vsel %vm508, %v650, 0
    %v696 = vsel %vm508, %v651, 0
    %v699 = vsel %vm508, %v652, 0
    %vm701 = vcmask 1043456
    %v703 = vsel %vm701, %v184, 0
    %705 = vmatpush.msra.mxu0 0.0
    %706 = vmatpush.msra.mxu0 0.0
    %707 = vmatpush.msra.mxu0 0.0
    %708 = vmatpush.msra.mxu0 0.0
    %709 = vmatpush.msra.mxu0 0.0
    %710 = vmatpush.msra.mxu0 0.0
    %711 = vmatpush.msra.mxu0 0.0
    %712 = vmatpush.msra.mxu0 0.0
    %713 = vmatpush.msra.mxu0 0.0
    %714 = vmatpush.msra.mxu0 0.0
    %715 = vmatpush.msra.mxu0 0.0
    %716 = vmatpush.msra.mxu0 0.0
    %717 = vmatpush.msra.mxu0 0.0
    %718 = vmatpush.msra.mxu0 0.0
    %719 = vmatpush.msra.mxu0 0.0
    %720 = vmatpush.msra.mxu0 %v703
    %721 = vmatmul.f32.gmra.mxu0 %v654
    %v722 = vpop.f32.mrf.mxu0
    %v723 = vadd.f32 0.0, %v722
    %724 = vmatmul.f32.gmra.mxu0 %v657
    %v725 = vpop.f32.mrf.mxu0
    %v726 = vadd.f32 0.0, %v725
    %727 = vmatmul.f32.gmra.mxu0 %v660
    %v728 = vpop.f32.mrf.mxu0
    %v729 = vadd.f32 0.0, %v728
    %730 = vmatmul.f32.gmra.mxu0 %v663
    %v731 = vpop.f32.mrf.mxu0
    %v732 = vadd.f32 0.0, %v731
    %733 = vmatmul.f32.gmra.mxu0 %v666
    %v734 = vpop.f32.mrf.mxu0
    %v735 = vadd.f32 0.0, %v734
    %736 = vmatmul.f32.gmra.mxu0 %v669
    %v737 = vpop.f32.mrf.mxu0
    %v738 = vadd.f32 0.0, %v737
    %739 = vmatmul.f32.gmra.mxu0 %v672
    %v740 = vpop.f32.mrf.mxu0
    %v741 = vadd.f32 0.0, %v740
    %742 = vmatmul.f32.gmra.mxu0 %v675
    %v743 = vpop.f32.mrf.mxu0
    %v744 = vadd.f32 0.0, %v743
    %745 = vmatmul.f32.gmra.mxu0 %v678
    %v746 = vpop.f32.mrf.mxu0
    %v747 = vadd.f32 0.0, %v746
    %748 = vmatmul.f32.gmra.mxu0 %v681
    %v749 = vpop.f32.mrf.mxu0
    %v750 = vadd.f32 0.0, %v749
    %751 = vmatmul.f32.gmra.mxu0 %v684
    %v752 = vpop.f32.mrf.mxu0
    %v753 = vadd.f32 0.0, %v752
    %754 = vmatmul.f32.gmra.mxu0 %v687
    %v755 = vpop.f32.mrf.mxu0
    %v756 = vadd.f32 0.0, %v755
    %757 = vmatmul.f32.gmra.mxu0 %v690
    %v758 = vpop.f32.mrf.mxu0
    %v759 = vadd.f32 0.0, %v758
    %760 = vmatmul.f32.gmra.mxu0 %v693
    %v761 = vpop.f32.mrf.mxu0
    %v762 = vadd.f32 0.0, %v761
    %763 = vmatmul.f32.gmra.mxu0 %v696
    %v764 = vpop.f32.mrf.mxu0
    %v765 = vadd.f32 0.0, %v764
    %766 = vmatmul.f32.gmra.mxu0 %v699
    %v767 = vpop.f32.mrf.mxu0
    %v768 = vadd.f32 0.0, %v767
    %769 = vdwg.mxu0
    %770 = vrot.lane.b32.xlu0 %v272, 64
    %v771 = vpop.permute.xlu0 %770
    %772 = vrot.lane.b32.xlu0 %v275, 64
    %v773 = vpop.permute.xlu0 %772
    %v776 = vmul.f32 %v723, %v771
    %v777 = vmul.f32 %v726, %v771
    %v778 = vmul.f32 %v729, %v771
    %v779 = vmul.f32 %v732, %v771
    %v780 = vmul.f32 %v735, %v771
    %v781 = vmul.f32 %v738, %v771
    %v782 = vmul.f32 %v741, %v771
    %v783 = vmul.f32 %v744, %v771
    %v784 = vmul.f32 %v747, %v773
    %v785 = vmul.f32 %v750, %v773
    %v786 = vmul.f32 %v753, %v773
    %v787 = vmul.f32 %v756, %v773
    %v788 = vmul.f32 %v759, %v773
    %v789 = vmul.f32 %v762, %v773
    %v790 = vmul.f32 %v765, %v773
    %v791 = vmul.f32 %v768, %v773
    %v792 = vsel %vm186, %v776, 0.0
    %v793 = vrot.slane %v792, 4
    %v794 = vadd.f32 %v792, %v793
    %v795 = vrot.slane %v794, 2
    %v796 = vadd.f32 %v794, %v795
    %v797 = vrot.slane %v796, 1
    %v798 = vadd.f32 %v796, %v797
    %v799 = vsel %vm186, %v777, 0.0
    %v800 = vrot.slane %v799, 4
    %v801 = vadd.f32 %v799, %v800
    %v802 = vrot.slane %v801, 2
    %v803 = vadd.f32 %v801, %v802
    %v804 = vrot.slane %v803, 1
    %v805 = vadd.f32 %v803, %v804
    %v806 = vsel %vm186, %v778, 0.0
    %v807 = vrot.slane %v806, 4
    %v808 = vadd.f32 %v806, %v807
    %v809 = vrot.slane %v808, 2
    %v810 = vadd.f32 %v808, %v809
    %v811 = vrot.slane %v810, 1
    %v812 = vadd.f32 %v810, %v811
    %v813 = vsel %vm186, %v779, 0.0
    %v814 = vrot.slane %v813, 4
    %v815 = vadd.f32 %v813, %v814
    %v816 = vrot.slane %v815, 2
    %v817 = vadd.f32 %v815, %v816
    %v818 = vrot.slane %v817, 1
    %v819 = vadd.f32 %v817, %v818
    %v820 = vsel %vm186, %v780, 0.0
    %v821 = vrot.slane %v820, 4
    %v822 = vadd.f32 %v820, %v821
    %v823 = vrot.slane %v822, 2
    %v824 = vadd.f32 %v822, %v823
    %v825 = vrot.slane %v824, 1
    %v826 = vadd.f32 %v824, %v825
    %v827 = vsel %vm186, %v781, 0.0
    %v828 = vrot.slane %v827, 4
    %v829 = vadd.f32 %v827, %v828
    %v830 = vrot.slane %v829, 2
    %v831 = vadd.f32 %v829, %v830
    %v832 = vrot.slane %v831, 1
    %v833 = vadd.f32 %v831, %v832
    %v834 = vsel %vm186, %v782, 0.0
    %v835 = vrot.slane %v834, 4
    %v836 = vadd.f32 %v834, %v835
    %v837 = vrot.slane %v836, 2
    %v838 = vadd.f32 %v836, %v837
    %v839 = vrot.slane %v838, 1
    %v840 = vadd.f32 %v838, %v839
    %v841 = vsel %vm186, %v783, 0.0
    %v842 = vrot.slane %v841, 4
    %v843 = vadd.f32 %v841, %v842
    %v844 = vrot.slane %v843, 2
    %v845 = vadd.f32 %v843, %v844
    %v846 = vrot.slane %v845, 1
    %v847 = vadd.f32 %v845, %v846
    %v848 = vsel %vm186, %v784, 0.0
    %v849 = vrot.slane %v848, 4
    %v850 = vadd.f32 %v848, %v849
    %v851 = vrot.slane %v850, 2
    %v852 = vadd.f32 %v850, %v851
    %v853 = vrot.slane %v852, 1
    %v854 = vadd.f32 %v852, %v853
    %v855 = vsel %vm186, %v785, 0.0
    %v856 = vrot.slane %v855, 4
    %v857 = vadd.f32 %v855, %v856
    %v858 = vrot.slane %v857, 2
    %v859 = vadd.f32 %v857, %v858
    %v860 = vrot.slane %v859, 1
    %v861 = vadd.f32 %v859, %v860
    %v862 = vsel %vm186, %v786, 0.0
    %v863 = vrot.slane %v862, 4
    %v864 = vadd.f32 %v862, %v863
    %v865 = vrot.slane %v864, 2
    %v866 = vadd.f32 %v864, %v865
    %v867 = vrot.slane %v866, 1
    %v868 = vadd.f32 %v866, %v867
    %v869 = vsel %vm186, %v787, 0.0
    %v870 = vrot.slane %v869, 4
    %v871 = vadd.f32 %v869, %v870
    %v872 = vrot.slane %v871, 2
    %v873 = vadd.f32 %v871, %v872
    %v874 = vrot.slane %v873, 1
    %v875 = vadd.f32 %v873, %v874
    %v876 = vsel %vm186, %v788, 0.0
    %v877 = vrot.slane %v876, 4
    %v878 = vadd.f32 %v876, %v877
    %v879 = vrot.slane %v878, 2
    %v880 = vadd.f32 %v878, %v879
    %v881 = vrot.slane %v880, 1
    %v882 = vadd.f32 %v880, %v881
    %v883 = vsel %vm186, %v789, 0.0
    %v884 = vrot.slane %v883, 4
    %v885 = vadd.f32 %v883, %v884
    %v886 = vrot.slane %v885, 2
    %v887 = vadd.f32 %v885, %v886
    %v888 = vrot.slane %v887, 1
    %v889 = vadd.f32 %v887, %v888
    %v890 = vsel %vm186, %v790, 0.0
    %v891 = vrot.slane %v890, 4
    %v892 = vadd.f32 %v890, %v891
    %v893 = vrot.slane %v892, 2
    %v894 = vadd.f32 %v892, %v893
    %v895 = vrot.slane %v894, 1
    %v896 = vadd.f32 %v894, %v895
    %v897 = vsel %vm186, %v791, 0.0
    %v898 = vrot.slane %v897, 4
    %v899 = vadd.f32 %v897, %v898
    %v900 = vrot.slane %v899, 2
    %v901 = vadd.f32 %v899, %v900
    %v902 = vrot.slane %v901, 1
    %v903 = vadd.f32 %v901, %v902
    %v904 = vld [vmem:[%s3] sm:$0xff]
    %v905 = vld [vmem:[%s3 + $0x8] sm:$0xff]
    %v906 = vld [vmem:[%s3 + $0x10] sm:$0xff]
    %v907 = vld [vmem:[%s3 + $0x18] sm:$0xff]
    %vm924 = vcmask 1041409
    %v925 = vsel %vm924, %v805, %v798
    %vm926 = vcmask 1042434
    %v927 = vsel %vm926, %v812, %v925
    %vm928 = vcmask 1043459
    %v929 = vsel %vm928, %v819, %v927
    %vm930 = vcmask 1044484
    %v931 = vsel %vm930, %v826, %v929
    %vm932 = vcmask 1045509
    %v933 = vsel %vm932, %v833, %v931
    %vm934 = vcmask 1046534
    %v935 = vsel %vm934, %v840, %v933
    %vm936 = vcmask 1047559
    %v937 = vsel %vm936, %v847, %v935
    %v938 = vsel %vm924, %v861, %v854
    %v939 = vsel %vm926, %v868, %v938
    %v940 = vsel %vm928, %v875, %v939
    %v941 = vsel %vm930, %v882, %v940
    %v942 = vsel %vm932, %v889, %v941
    %v943 = vsel %vm934, %v896, %v942
    %v944 = vsel %vm936, %v903, %v943
    %v945 = vsel %vm186, %v937, 0
    %v947 = vsel %vm186, %v944, 0
    %949 = vmatpush.msra.mxu0 0.0
    %950 = vmatpush.msra.mxu0 0.0
    %951 = vmatpush.msra.mxu0 0.0
    %952 = vmatpush.msra.mxu0 0.0
    %953 = vmatpush.msra.mxu0 0.0
    %954 = vmatpush.msra.mxu0 0.0
    %955 = vmatpush.msra.mxu0 0.0
    %956 = vmatpush.msra.mxu0 0.0
    %957 = vmatpush.msra.mxu0 0.0
    %958 = vmatpush.msra.mxu0 0.0
    %959 = vmatpush.msra.mxu0 0.0
    %960 = vmatpush.msra.mxu0 0.0
    %961 = vmatpush.msra.mxu0 %v907
    %962 = vmatpush.msra.mxu0 %v906
    %963 = vmatpush.msra.mxu0 %v905
    %964 = vmatpush.msra.mxu0 %v904
    %965 = vmatmul.f32.gmra.mxu0 %v945
    %v966 = vpop.f32.mrf.mxu0
    %v967 = vadd.f32 0.0, %v966
    %968 = vmatmul.f32.gmra.mxu0 %v947
    %v969 = vpop.f32.mrf.mxu0
    %v970 = vadd.f32 0.0, %v969
    %971 = vdwg.mxu0
    %v972 = vadd.f32 %v130, %v967
    %v973 = vadd.f32 %v133, %v970
    %v974 = vperm.slane %v185, 4
    %v975 = vadd.f32 %v972, %v974
    %v976 = vadd.f32 %v973, %v974
    %v977 = vsel %vm186, %v975, 0.0
    %978 = vadd.xlane.f32.xlu0 %v977
    %v979 = vpop.xlane.xlu0 %978
    %v980 = vsel %vm186, %v976, 0.0
    %981 = vadd.xlane.f32.xlu0 %v980
    %v982 = vpop.xlane.xlu0 %981
    %v983 = vmul.f32 %v979, %v199
    %v984 = vmul.f32 %v982, %v199
    %v985 = vsub.f32 %v975, %v983
    %v986 = vsub.f32 %v976, %v984
    %v987 = vmul.f32 %v985, %v985
    %v988 = vmul.f32 %v986, %v986
    %v989 = vsel %vm186, %v987, 0.0
    %990 = vadd.xlane.f32.xlu0 %v989
    %v991 = vpop.xlane.xlu0 %990
    %v992 = vsel %vm186, %v988, 0.0
    %993 = vadd.xlane.f32.xlu0 %v992
    %v994 = vpop.xlane.xlu0 %993
    %v995 = vmul.f32 %v991, %v199
    %v996 = vmul.f32 %v994, %v199
    %v997 = vadd.f32 %v995, 1e-05
    %v998 = vadd.f32 %v996, 1e-05
    %v999 = vrsqrt.pop %v997
    %v1000 = vmul.f32 %v999, %v997
    %v1001 = vmul.f32 %v1000, %v999
    %v1002 = vmul.f32 0.5, %v1001
    %v1003 = vsub.f32 1.5, %v1002
    %v1004 = vmul.f32 %v999, %v1003
    %vm1005 = vweird.f32 %v997
    %vm1006 = vweird.f32 %v999
    %vm1007 = vmor %vm1005, %vm1006
    %v1008 = vsel %vm1007, %v999, %v1004
    %v1009 = vrsqrt.pop %v998
    %v1010 = vmul.f32 %v1009, %v998
    %v1011 = vmul.f32 %v1010, %v1009
    %v1012 = vmul.f32 0.5, %v1011
    %v1013 = vsub.f32 1.5, %v1012
    %v1014 = vmul.f32 %v1009, %v1013
    %vm1015 = vweird.f32 %v998
    %vm1016 = vweird.f32 %v1009
    %vm1017 = vmor %vm1015, %vm1016
    %v1018 = vsel %vm1017, %v1009, %v1014
    %v1019 = vmul.f32 %v985, %v1008
    %v1020 = vmul.f32 %v986, %v1018
    %v1021 = vperm.slane %v185, 2
    %v1022 = vmul.f32 %v1019, %v1021
    %v1023 = vmul.f32 %v1020, %v1021
    %v1024 = vperm.slane %v185, 3
    %v1025 = vadd.f32 %v1022, %v1024
    %v1026 = vadd.f32 %v1023, %v1024
    %v1027 = vld [vmem:[%s4] sm:$0xff]
    %v1028 = vld [vmem:[%s4 + $0x8] sm:$0xff]
    %v1029 = vld [vmem:[%s4 + $0x10] sm:$0xff]
    %v1030 = vld [vmem:[%s4 + $0x18] sm:$0xff]
    %v1031 = vperm.slane %v185, 6
    %v1033 = vsel %vm186, %v1025, 0
    %v1036 = vsel %vm186, %v1026, 0
    %1038 = vmatpush.msra.mxu0 0.0
    %1039 = vmatpush.msra.mxu0 0.0
    %1040 = vmatpush.msra.mxu0 0.0
    %1041 = vmatpush.msra.mxu0 0.0
    %1042 = vmatpush.msra.mxu0 0.0
    %1043 = vmatpush.msra.mxu0 0.0
    %1044 = vmatpush.msra.mxu0 0.0
    %1045 = vmatpush.msra.mxu0 0.0
    %1046 = vmatpush.msra.mxu0 0.0
    %1047 = vmatpush.msra.mxu0 0.0
    %1048 = vmatpush.msra.mxu0 0.0
    %1049 = vmatpush.msra.mxu0 0.0
    %1050 = vmatpush.msra.mxu0 %v1030
    %1051 = vmatpush.msra.mxu0 %v1029
    %1052 = vmatpush.msra.mxu0 %v1028
    %1053 = vmatpush.msra.mxu0 %v1027
    %1054 = vmatmul.f32.gmra.mxu0 %v1033
    %v1055 = vpop.f32.mrf.mxu0
    %v1056 = vadd.f32 %v1031, %v1055
    %1057 = vmatmul.f32.gmra.mxu0 %v1036
    %v1058 = vpop.f32.mrf.mxu0
    %v1059 = vadd.f32 %v1031, %v1058
    %1060 = vdwg.mxu0
    %v1061 = vmax.f32 %v1056, 0.0
    %v1062 = vmax.f32 %v1059, 0.0
    %v1063 = vld [vmem:[%s5] sm:$0xff]
    %v1064 = vld [vmem:[%s5 + $0x8] sm:$0xff]
    %v1065 = vld [vmem:[%s5 + $0x10] sm:$0xff]
    %v1066 = vld [vmem:[%s5 + $0x18] sm:$0xff]
    %v1067 = vld [vmem:[%s5 + $0x20] sm:$0xff]
    %v1068 = vld [vmem:[%s5 + $0x28] sm:$0xff]
    %v1069 = vld [vmem:[%s5 + $0x30] sm:$0xff]
    %v1070 = vld [vmem:[%s5 + $0x38] sm:$0xff]
    %v1071 = vld [vmem:[%s5 + $0x40] sm:$0xff]
    %v1072 = vld [vmem:[%s5 + $0x48] sm:$0xff]
    %v1073 = vld [vmem:[%s5 + $0x50] sm:$0xff]
    %v1074 = vld [vmem:[%s5 + $0x58] sm:$0xff]
    %v1075 = vld [vmem:[%s5 + $0x60] sm:$0xff]
    %v1076 = vld [vmem:[%s5 + $0x68] sm:$0xff]
    %v1077 = vld [vmem:[%s5 + $0x70] sm:$0xff]
    %v1078 = vld [vmem:[%s5 + $0x78] sm:$0xff]
    %1079 = vmatpush.msra.mxu0 %v1078
    %1080 = vmatpush.msra.mxu0 %v1077
    %1081 = vmatpush.msra.mxu0 %v1076
    %1082 = vmatpush.msra.mxu0 %v1075
    %1083 = vmatpush.msra.mxu0 %v1074
    %1084 = vmatpush.msra.mxu0 %v1073
    %1085 = vmatpush.msra.mxu0 %v1072
    %1086 = vmatpush.msra.mxu0 %v1071
    %1087 = vmatpush.msra.mxu0 %v1070
    %1088 = vmatpush.msra.mxu0 %v1069
    %1089 = vmatpush.msra.mxu0 %v1068
    %1090 = vmatpush.msra.mxu0 %v1067
    %1091 = vmatpush.msra.mxu0 %v1066
    %1092 = vmatpush.msra.mxu0 %v1065
    %1093 = vmatpush.msra.mxu0 %v1064
    %1094 = vmatpush.msra.mxu0 %v1063
    %1095 = vmatmul.f32.gmra.mxu0 %v1061
    %v1096 = vpop.f32.mrf.mxu0
    %v1097 = vadd.f32 0.0, %v1096
    %1098 = vmatmul.f32.gmra.mxu0 %v1062
    %v1099 = vpop.f32.mrf.mxu0
    %v1100 = vadd.f32 0.0, %v1099
    %1101 = vdwg.mxu0
    %v1102 = vadd.f32 %v975, %v1097
    %v1103 = vadd.f32 %v976, %v1100
    %v1104 = vperm.slane %v185, 5
    %v1105 = vadd.f32 %v1102, %v1104
    %v1106 = vadd.f32 %v1103, %v1104
    %s1107 = scalar_lea.vmem %s6, 8
    %v1108 = vld [vmem:[%s1107] sm:$0xff]
    %v1109 = vsel %vm186, %v1105, 0.0
    %1110 = vadd.xlane.f32.xlu0 %v1109
    %v1111 = vpop.xlane.xlu0 %1110
    %v1112 = vsel %vm186, %v1106, 0.0
    %1113 = vadd.xlane.f32.xlu0 %v1112
    %v1114 = vpop.xlane.xlu0 %1113
    %v1115 = vmul.f32 %v1111, %v199
    %v1116 = vmul.f32 %v1114, %v199
    %v1117 = vsub.f32 %v1105, %v1115
    %v1118 = vsub.f32 %v1106, %v1116
    %v1119 = vmul.f32 %v1117, %v1117
    %v1120 = vmul.f32 %v1118, %v1118
    %v1121 = vsel %vm186, %v1119, 0.0
    %1122 = vadd.xlane.f32.xlu0 %v1121
    %v1123 = vpop.xlane.xlu0 %1122
    %v1124 = vsel %vm186, %v1120, 0.0
    %1125 = vadd.xlane.f32.xlu0 %v1124
    %v1126 = vpop.xlane.xlu0 %1125
    %v1127 = vmul.f32 %v1123, %v199
    %v1128 = vmul.f32 %v1126, %v199
    %v1129 = vadd.f32 %v1127, 1e-05
    %v1130 = vadd.f32 %v1128, 1e-05
    %v1131 = vrsqrt.pop %v1129
    %v1132 = vmul.f32 %v1131, %v1129
    %v1133 = vmul.f32 %v1132, %v1131
    %v1134 = vmul.f32 0.5, %v1133
    %v1135 = vsub.f32 1.5, %v1134
    %v1136 = vmul.f32 %v1131, %v1135
    %vm1137 = vweird.f32 %v1129
    %vm1138 = vweird.f32 %v1131
    %vm1139 = vmor %vm1137, %vm1138
    %v1140 = vsel %vm1139, %v1131, %v1136
    %v1141 = vrsqrt.pop %v1130
    %v1142 = vmul.f32 %v1141, %v1130
    %v1143 = vmul.f32 %v1142, %v1141
    %v1144 = vmul.f32 0.5, %v1143
    %v1145 = vsub.f32 1.5, %v1144
    %v1146 = vmul.f32 %v1141, %v1145
    %vm1147 = vweird.f32 %v1130
    %vm1148 = vweird.f32 %v1141
    %vm1149 = vmor %vm1147, %vm1148
    %v1150 = vsel %vm1149, %v1141, %v1146
    %v1151 = vmul.f32 %v1117, %v1140
    %v1152 = vmul.f32 %v1118, %v1150
    %v1153 = vperm.slane %v1108, 0
    %v1154 = vmul.f32 %v1151, %v1153
    %v1155 = vmul.f32 %v1152, %v1153
    %v1156 = vperm.slane %v1108, 1
    %v1157 = vadd.f32 %v1154, %v1156
    %v1158 = vadd.f32 %v1155, %v1156
    %s1159 = scalar_lea.vmem %s2, 32
    %v1160 = vld [vmem:[%s1159] sm:$0xff]
    %v1161 = vld [vmem:[%s1159 + $0x8] sm:$0xff]
    %v1162 = vld [vmem:[%s1159 + $0x10] sm:$0xff]
    %v1163 = vld [vmem:[%s1159 + $0x18] sm:$0xff]
    %v1165 = vsel %vm186, %v1157, 0
    %v1168 = vsel %vm186, %v1158, 0
    %1170 = vmatpush.msra.mxu0 0.0
    %1171 = vmatpush.msra.mxu0 0.0
    %1172 = vmatpush.msra.mxu0 0.0
    %1173 = vmatpush.msra.mxu0 0.0
    %1174 = vmatpush.msra.mxu0 0.0
    %1175 = vmatpush.msra.mxu0 0.0
    %1176 = vmatpush.msra.mxu0 0.0
    %1177 = vmatpush.msra.mxu0 0.0
    %1178 = vmatpush.msra.mxu0 0.0
    %1179 = vmatpush.msra.mxu0 0.0
    %1180 = vmatpush.msra.mxu0 0.0
    %1181 = vmatpush.msra.mxu0 0.0
    %1182 = vmatpush.msra.mxu0 %v1163
    %1183 = vmatpush.msra.mxu0 %v1162
    %1184 = vmatpush.msra.mxu0 %v1161
    %1185 = vmatpush.msra.mxu0 %v1160
    %1186 = vmatmul.f32.gmra.mxu0 %v1165
    %v1187 = vpop.f32.mrf.mxu0
    %v1188 = vadd.f32 0.0, %v1187
    %1189 = vmatmul.f32.gmra.mxu0 %v1168
    %v1190 = vpop.f32.mrf.mxu0
    %v1191 = vadd.f32 0.0, %v1190
    %1192 = vdwg.mxu0
    %v1195 = vrot.slane %v1188, 1
    %v1196 = vrot.slane %v1188, 2
    %v1197 = vrot.slane %v1188, 3
    %v1198 = vrot.slane %v1188, 4
    %v1199 = vrot.slane %v1188, 5
    %v1200 = vrot.slane %v1188, 6
    %v1201 = vrot.slane %v1188, 7
    %v1202 = vrot.slane %v1191, 1
    %v1203 = vrot.slane %v1191, 2
    %v1204 = vrot.slane %v1191, 3
    %v1205 = vrot.slane %v1191, 4
    %v1206 = vrot.slane %v1191, 5
    %v1207 = vrot.slane %v1191, 6
    %v1208 = vrot.slane %v1191, 7
    %v1209 = vperm.slane %v1188, 0
    %v1210 = vperm.slane %v1195, 0
    %v1211 = vperm.slane %v1196, 0
    %v1212 = vperm.slane %v1197, 0
    %v1213 = vperm.slane %v1198, 0
    %v1214 = vperm.slane %v1199, 0
    %v1215 = vperm.slane %v1200, 0
    %v1216 = vperm.slane %v1201, 0
    %v1217 = vperm.slane %v1191, 0
    %v1218 = vperm.slane %v1202, 0
    %v1219 = vperm.slane %v1203, 0
    %v1220 = vperm.slane %v1204, 0
    %v1221 = vperm.slane %v1205, 0
    %v1222 = vperm.slane %v1206, 0
    %v1223 = vperm.slane %v1207, 0
    %v1224 = vperm.slane %v1208, 0
    %1241 = vrot.lane.b32.xlu0 %v1188, 96
    %v1242 = vpop.permute.xlu0 %1241
    %1243 = vrot.lane.b32.xlu0 %v1191, 96
    %v1244 = vpop.permute.xlu0 %1243
    %v1247 = vmul.f32 %v1209, %v1242
    %v1248 = vmul.f32 %v1210, %v1242
    %v1249 = vmul.f32 %v1211, %v1242
    %v1250 = vmul.f32 %v1212, %v1242
    %v1251 = vmul.f32 %v1213, %v1242
    %v1252 = vmul.f32 %v1214, %v1242
    %v1253 = vmul.f32 %v1215, %v1242
    %v1254 = vmul.f32 %v1216, %v1242
    %v1255 = vmul.f32 %v1217, %v1244
    %v1256 = vmul.f32 %v1218, %v1244
    %v1257 = vmul.f32 %v1219, %v1244
    %v1258 = vmul.f32 %v1220, %v1244
    %v1259 = vmul.f32 %v1221, %v1244
    %v1260 = vmul.f32 %v1222, %v1244
    %v1261 = vmul.f32 %v1223, %v1244
    %v1262 = vmul.f32 %v1224, %v1244
    %v1264 = vsel %vm186, %v1247, 0
    %v1267 = vsel %vm186, %v1248, 0
    %v1270 = vsel %vm186, %v1249, 0
    %v1273 = vsel %vm186, %v1250, 0
    %v1276 = vsel %vm186, %v1251, 0
    %v1279 = vsel %vm186, %v1252, 0
    %v1282 = vsel %vm186, %v1253, 0
    %v1285 = vsel %vm186, %v1254, 0
    %v1288 = vsel %vm186, %v1255, 0
    %v1291 = vsel %vm186, %v1256, 0
    %v1294 = vsel %vm186, %v1257, 0
    %v1297 = vsel %vm186, %v1258, 0
    %v1300 = vsel %vm186, %v1259, 0
    %v1303 = vsel %vm186, %v1260, 0
    %v1306 = vsel %vm186, %v1261, 0
    %v1309 = vsel %vm186, %v1262, 0
    %1311 = vmatpush.msra.mxu0 0.0
    %1312 = vmatpush.msra.mxu0 0.0
    %1313 = vmatpush.msra.mxu0 0.0
    %1314 = vmatpush.msra.mxu0 0.0
    %1315 = vmatpush.msra.mxu0 0.0
    %1316 = vmatpush.msra.mxu0 0.0
    %1317 = vmatpush.msra.mxu0 0.0
    %1318 = vmatpush.msra.mxu0 0.0
    %1319 = vmatpush.msra.mxu0 0.0
    %1320 = vmatpush.msra.mxu0 0.0
    %1321 = vmatpush.msra.mxu0 0.0
    %1322 = vmatpush.msra.mxu0 0.0
    %1323 = vmatpush.msra.mxu0 %v176
    %1324 = vmatpush.msra.mxu0 %v175
    %1325 = vmatpush.msra.mxu0 %v174
    %1326 = vmatpush.msra.mxu0 %v173
    %1327 = vmatmul.f32.gmra.mxu0 %v1264
    %v1328 = vpop.f32.mrf.mxu0
    %v1329 = vadd.f32 0.0, %v1328
    %1330 = vmatmul.f32.gmra.mxu0 %v1267
    %v1331 = vpop.f32.mrf.mxu0
    %v1332 = vadd.f32 0.0, %v1331
    %1333 = vmatmul.f32.gmra.mxu0 %v1270
    %v1334 = vpop.f32.mrf.mxu0
    %v1335 = vadd.f32 0.0, %v1334
    %1336 = vmatmul.f32.gmra.mxu0 %v1273
    %v1337 = vpop.f32.mrf.mxu0
    %v1338 = vadd.f32 0.0, %v1337
    %1339 = vmatmul.f32.gmra.mxu0 %v1276
    %v1340 = vpop.f32.mrf.mxu0
    %v1341 = vadd.f32 0.0, %v1340
    %1342 = vmatmul.f32.gmra.mxu0 %v1279
    %v1343 = vpop.f32.mrf.mxu0
    %v1344 = vadd.f32 0.0, %v1343
    %1345 = vmatmul.f32.gmra.mxu0 %v1282
    %v1346 = vpop.f32.mrf.mxu0
    %v1347 = vadd.f32 0.0, %v1346
    %1348 = vmatmul.f32.gmra.mxu0 %v1285
    %v1349 = vpop.f32.mrf.mxu0
    %v1350 = vadd.f32 0.0, %v1349
    %1351 = vmatmul.f32.gmra.mxu0 %v1288
    %v1352 = vpop.f32.mrf.mxu0
    %v1353 = vadd.f32 0.0, %v1352
    %1354 = vmatmul.f32.gmra.mxu0 %v1291
    %v1355 = vpop.f32.mrf.mxu0
    %v1356 = vadd.f32 0.0, %v1355
    %1357 = vmatmul.f32.gmra.mxu0 %v1294
    %v1358 = vpop.f32.mrf.mxu0
    %v1359 = vadd.f32 0.0, %v1358
    %1360 = vmatmul.f32.gmra.mxu0 %v1297
    %v1361 = vpop.f32.mrf.mxu0
    %v1362 = vadd.f32 0.0, %v1361
    %1363 = vmatmul.f32.gmra.mxu0 %v1300
    %v1364 = vpop.f32.mrf.mxu0
    %v1365 = vadd.f32 0.0, %v1364
    %1366 = vmatmul.f32.gmra.mxu0 %v1303
    %v1367 = vpop.f32.mrf.mxu0
    %v1368 = vadd.f32 0.0, %v1367
    %1369 = vmatmul.f32.gmra.mxu0 %v1306
    %v1370 = vpop.f32.mrf.mxu0
    %v1371 = vadd.f32 0.0, %v1370
    %1372 = vmatmul.f32.gmra.mxu0 %v1309
    %v1373 = vpop.f32.mrf.mxu0
    %v1374 = vadd.f32 0.0, %v1373
    %1375 = vdwg.mxu0
    %v1376 = vadd.f32 %v1329, %v143
    %v1377 = vadd.f32 %v1332, %v144
    %v1378 = vadd.f32 %v1335, %v145
    %v1379 = vadd.f32 %v1338, %v146
    %v1380 = vadd.f32 %v1341, %v147
    %v1381 = vadd.f32 %v1344, %v148
    %v1382 = vadd.f32 %v1347, %v149
    %v1383 = vadd.f32 %v1350, %v150
    %v1384 = vadd.f32 %v1353, %v143
    %v1385 = vadd.f32 %v1356, %v144
    %v1386 = vadd.f32 %v1359, %v145
    %v1387 = vadd.f32 %v1362, %v146
    %v1388 = vadd.f32 %v1365, %v147
    %v1389 = vadd.f32 %v1368, %v148
    %v1390 = vadd.f32 %v1371, %v149
    %v1391 = vadd.f32 %v1374, %v150
    %v1392 = vmul.f32 %v1376, 1.442695
    %v1393 = vpow.pop %v1392
    %v1394 = vmul.f32 %v1377, 1.442695
    %v1395 = vpow.pop %v1394
    %v1396 = vmul.f32 %v1378, 1.442695
    %v1397 = vpow.pop %v1396
    %v1398 = vmul.f32 %v1379, 1.442695
    %v1399 = vpow.pop %v1398
    %v1400 = vmul.f32 %v1380, 1.442695
    %v1401 = vpow.pop %v1400
    %v1402 = vmul.f32 %v1381, 1.442695
    %v1403 = vpow.pop %v1402
    %v1404 = vmul.f32 %v1382, 1.442695
    %v1405 = vpow.pop %v1404
    %v1406 = vmul.f32 %v1383, 1.442695
    %v1407 = vpow.pop %v1406
    %v1408 = vmul.f32 %v1384, 1.442695
    %v1409 = vpow.pop %v1408
    %v1410 = vmul.f32 %v1385, 1.442695
    %v1411 = vpow.pop %v1410
    %v1412 = vmul.f32 %v1386, 1.442695
    %v1413 = vpow.pop %v1412
    %v1414 = vmul.f32 %v1387, 1.442695
    %v1415 = vpow.pop %v1414
    %v1416 = vmul.f32 %v1388, 1.442695
    %v1417 = vpow.pop %v1416
    %v1418 = vmul.f32 %v1389, 1.442695
    %v1419 = vpow.pop %v1418
    %v1420 = vmul.f32 %v1390, 1.442695
    %v1421 = vpow.pop %v1420
    %v1422 = vmul.f32 %v1391, 1.442695
    %v1423 = vpow.pop %v1422
    %v1424 = vsel %vm508, %v1393, 0.0
    %v1425 = vrot.slane %v1424, 4
    %v1426 = vadd.f32 %v1424, %v1425
    %v1427 = vrot.slane %v1426, 2
    %v1428 = vadd.f32 %v1426, %v1427
    %v1429 = vrot.slane %v1428, 1
    %v1430 = vadd.f32 %v1428, %v1429
    %v1431 = vsel %vm508, %v1395, 0.0
    %v1432 = vrot.slane %v1431, 4
    %v1433 = vadd.f32 %v1431, %v1432
    %v1434 = vrot.slane %v1433, 2
    %v1435 = vadd.f32 %v1433, %v1434
    %v1436 = vrot.slane %v1435, 1
    %v1437 = vadd.f32 %v1435, %v1436
    %v1438 = vsel %vm508, %v1397, 0.0
    %v1439 = vrot.slane %v1438, 4
    %v1440 = vadd.f32 %v1438, %v1439
    %v1441 = vrot.slane %v1440, 2
    %v1442 = vadd.f32 %v1440, %v1441
    %v1443 = vrot.slane %v1442, 1
    %v1444 = vadd.f32 %v1442, %v1443
    %v1445 = vsel %vm508, %v1399, 0.0
    %v1446 = vrot.slane %v1445, 4
    %v1447 = vadd.f32 %v1445, %v1446
    %v1448 = vrot.slane %v1447, 2
    %v1449 = vadd.f32 %v1447, %v1448
    %v1450 = vrot.slane %v1449, 1
    %v1451 = vadd.f32 %v1449, %v1450
    %v1452 = vsel %vm508, %v1401, 0.0
    %v1453 = vrot.slane %v1452, 4
    %v1454 = vadd.f32 %v1452, %v1453
    %v1455 = vrot.slane %v1454, 2
    %v1456 = vadd.f32 %v1454, %v1455
    %v1457 = vrot.slane %v1456, 1
    %v1458 = vadd.f32 %v1456, %v1457
    %v1459 = vsel %vm508, %v1403, 0.0
    %v1460 = vrot.slane %v1459, 4
    %v1461 = vadd.f32 %v1459, %v1460
    %v1462 = vrot.slane %v1461, 2
    %v1463 = vadd.f32 %v1461, %v1462
    %v1464 = vrot.slane %v1463, 1
    %v1465 = vadd.f32 %v1463, %v1464
    %v1466 = vsel %vm508, %v1405, 0.0
    %v1467 = vrot.slane %v1466, 4
    %v1468 = vadd.f32 %v1466, %v1467
    %v1469 = vrot.slane %v1468, 2
    %v1470 = vadd.f32 %v1468, %v1469
    %v1471 = vrot.slane %v1470, 1
    %v1472 = vadd.f32 %v1470, %v1471
    %v1473 = vsel %vm508, %v1407, 0.0
    %v1474 = vrot.slane %v1473, 4
    %v1475 = vadd.f32 %v1473, %v1474
    %v1476 = vrot.slane %v1475, 2
    %v1477 = vadd.f32 %v1475, %v1476
    %v1478 = vrot.slane %v1477, 1
    %v1479 = vadd.f32 %v1477, %v1478
    %v1480 = vsel %vm508, %v1409, 0.0
    %v1481 = vrot.slane %v1480, 4
    %v1482 = vadd.f32 %v1480, %v1481
    %v1483 = vrot.slane %v1482, 2
    %v1484 = vadd.f32 %v1482, %v1483
    %v1485 = vrot.slane %v1484, 1
    %v1486 = vadd.f32 %v1484, %v1485
    %v1487 = vsel %vm508, %v1411, 0.0
    %v1488 = vrot.slane %v1487, 4
    %v1489 = vadd.f32 %v1487, %v1488
    %v1490 = vrot.slane %v1489, 2
    %v1491 = vadd.f32 %v1489, %v1490
    %v1492 = vrot.slane %v1491, 1
    %v1493 = vadd.f32 %v1491, %v1492
    %v1494 = vsel %vm508, %v1413, 0.0
    %v1495 = vrot.slane %v1494, 4
    %v1496 = vadd.f32 %v1494, %v1495
    %v1497 = vrot.slane %v1496, 2
    %v1498 = vadd.f32 %v1496, %v1497
    %v1499 = vrot.slane %v1498, 1
    %v1500 = vadd.f32 %v1498, %v1499
    %v1501 = vsel %vm508, %v1415, 0.0
    %v1502 = vrot.slane %v1501, 4
    %v1503 = vadd.f32 %v1501, %v1502
    %v1504 = vrot.slane %v1503, 2
    %v1505 = vadd.f32 %v1503, %v1504
    %v1506 = vrot.slane %v1505, 1
    %v1507 = vadd.f32 %v1505, %v1506
    %v1508 = vsel %vm508, %v1417, 0.0
    %v1509 = vrot.slane %v1508, 4
    %v1510 = vadd.f32 %v1508, %v1509
    %v1511 = vrot.slane %v1510, 2
    %v1512 = vadd.f32 %v1510, %v1511
    %v1513 = vrot.slane %v1512, 1
    %v1514 = vadd.f32 %v1512, %v1513
    %v1515 = vsel %vm508, %v1419, 0.0
    %v1516 = vrot.slane %v1515, 4
    %v1517 = vadd.f32 %v1515, %v1516
    %v1518 = vrot.slane %v1517, 2
    %v1519 = vadd.f32 %v1517, %v1518
    %v1520 = vrot.slane %v1519, 1
    %v1521 = vadd.f32 %v1519, %v1520
    %v1522 = vsel %vm508, %v1421, 0.0
    %v1523 = vrot.slane %v1522, 4
    %v1524 = vadd.f32 %v1522, %v1523
    %v1525 = vrot.slane %v1524, 2
    %v1526 = vadd.f32 %v1524, %v1525
    %v1527 = vrot.slane %v1526, 1
    %v1528 = vadd.f32 %v1526, %v1527
    %v1529 = vsel %vm508, %v1423, 0.0
    %v1530 = vrot.slane %v1529, 4
    %v1531 = vadd.f32 %v1529, %v1530
    %v1532 = vrot.slane %v1531, 2
    %v1533 = vadd.f32 %v1531, %v1532
    %v1534 = vrot.slane %v1533, 1
    %v1535 = vadd.f32 %v1533, %v1534
    %v1536 = vrcp.pop %v1430
    %v1537 = vrcp.pop %v1437
    %v1538 = vrcp.pop %v1444
    %v1539 = vrcp.pop %v1451
    %v1540 = vrcp.pop %v1458
    %v1541 = vrcp.pop %v1465
    %v1542 = vrcp.pop %v1472
    %v1543 = vrcp.pop %v1479
    %v1544 = vrcp.pop %v1486
    %v1545 = vrcp.pop %v1493
    %v1546 = vrcp.pop %v1500
    %v1547 = vrcp.pop %v1507
    %v1548 = vrcp.pop %v1514
    %v1549 = vrcp.pop %v1521
    %v1550 = vrcp.pop %v1528
    %v1551 = vrcp.pop %v1535
    %v1552 = vmul.f32 %v1393, %v1536
    %v1553 = vmul.f32 %v1395, %v1537
    %v1554 = vmul.f32 %v1397, %v1538
    %v1555 = vmul.f32 %v1399, %v1539
    %v1556 = vmul.f32 %v1401, %v1540
    %v1557 = vmul.f32 %v1403, %v1541
    %v1558 = vmul.f32 %v1405, %v1542
    %v1559 = vmul.f32 %v1407, %v1543
    %v1560 = vmul.f32 %v1409, %v1544
    %v1561 = vmul.f32 %v1411, %v1545
    %v1562 = vmul.f32 %v1413, %v1546
    %v1563 = vmul.f32 %v1415, %v1547
    %v1564 = vmul.f32 %v1417, %v1548
    %v1565 = vmul.f32 %v1419, %v1549
    %v1566 = vmul.f32 %v1421, %v1550
    %v1567 = vmul.f32 %v1423, %v1551
    %v1569 = vsel %vm508, %v1552, 0
    %v1572 = vsel %vm508, %v1553, 0
    %v1575 = vsel %vm508, %v1554, 0
    %v1578 = vsel %vm508, %v1555, 0
    %v1581 = vsel %vm508, %v1556, 0
    %v1584 = vsel %vm508, %v1557, 0
    %v1587 = vsel %vm508, %v1558, 0
    %v1590 = vsel %vm508, %v1559, 0
    %v1593 = vsel %vm508, %v1560, 0
    %v1596 = vsel %vm508, %v1561, 0
    %v1599 = vsel %vm508, %v1562, 0
    %v1602 = vsel %vm508, %v1563, 0
    %v1605 = vsel %vm508, %v1564, 0
    %v1608 = vsel %vm508, %v1565, 0
    %v1611 = vsel %vm508, %v1566, 0
    %v1614 = vsel %vm508, %v1567, 0
    %1616 = vmatpush.msra.mxu0 0.0
    %1617 = vmatpush.msra.mxu0 0.0
    %1618 = vmatpush.msra.mxu0 0.0
    %1619 = vmatpush.msra.mxu0 0.0
    %1620 = vmatpush.msra.mxu0 0.0
    %1621 = vmatpush.msra.mxu0 0.0
    %1622 = vmatpush.msra.mxu0 0.0
    %1623 = vmatpush.msra.mxu0 0.0
    %1624 = vmatpush.msra.mxu0 0.0
    %1625 = vmatpush.msra.mxu0 0.0
    %1626 = vmatpush.msra.mxu0 0.0
    %1627 = vmatpush.msra.mxu0 0.0
    %1628 = vmatpush.msra.mxu0 0.0
    %1629 = vmatpush.msra.mxu0 0.0
    %1630 = vmatpush.msra.mxu0 0.0
    %1631 = vmatpush.msra.mxu0 %v703
    %1632 = vmatmul.f32.gmra.mxu0 %v1569
    %v1633 = vpop.f32.mrf.mxu0
    %v1634 = vadd.f32 0.0, %v1633
    %1635 = vmatmul.f32.gmra.mxu0 %v1572
    %v1636 = vpop.f32.mrf.mxu0
    %v1637 = vadd.f32 0.0, %v1636
    %1638 = vmatmul.f32.gmra.mxu0 %v1575
    %v1639 = vpop.f32.mrf.mxu0
    %v1640 = vadd.f32 0.0, %v1639
    %1641 = vmatmul.f32.gmra.mxu0 %v1578
    %v1642 = vpop.f32.mrf.mxu0
    %v1643 = vadd.f32 0.0, %v1642
    %1644 = vmatmul.f32.gmra.mxu0 %v1581
    %v1645 = vpop.f32.mrf.mxu0
    %v1646 = vadd.f32 0.0, %v1645
    %1647 = vmatmul.f32.gmra.mxu0 %v1584
    %v1648 = vpop.f32.mrf.mxu0
    %v1649 = vadd.f32 0.0, %v1648
    %1650 = vmatmul.f32.gmra.mxu0 %v1587
    %v1651 = vpop.f32.mrf.mxu0
    %v1652 = vadd.f32 0.0, %v1651
    %1653 = vmatmul.f32.gmra.mxu0 %v1590
    %v1654 = vpop.f32.mrf.mxu0
    %v1655 = vadd.f32 0.0, %v1654
    %1656 = vmatmul.f32.gmra.mxu0 %v1593
    %v1657 = vpop.f32.mrf.mxu0
    %v1658 = vadd.f32 0.0, %v1657
    %1659 = vmatmul.f32.gmra.mxu0 %v1596
    %v1660 = vpop.f32.mrf.mxu0
    %v1661 = vadd.f32 0.0, %v1660
    %1662 = vmatmul.f32.gmra.mxu0 %v1599
    %v1663 = vpop.f32.mrf.mxu0
    %v1664 = vadd.f32 0.0, %v1663
    %1665 = vmatmul.f32.gmra.mxu0 %v1602
    %v1666 = vpop.f32.mrf.mxu0
    %v1667 = vadd.f32 0.0, %v1666
    %1668 = vmatmul.f32.gmra.mxu0 %v1605
    %v1669 = vpop.f32.mrf.mxu0
    %v1670 = vadd.f32 0.0, %v1669
    %1671 = vmatmul.f32.gmra.mxu0 %v1608
    %v1672 = vpop.f32.mrf.mxu0
    %v1673 = vadd.f32 0.0, %v1672
    %1674 = vmatmul.f32.gmra.mxu0 %v1611
    %v1675 = vpop.f32.mrf.mxu0
    %v1676 = vadd.f32 0.0, %v1675
    %1677 = vmatmul.f32.gmra.mxu0 %v1614
    %v1678 = vpop.f32.mrf.mxu0
    %v1679 = vadd.f32 0.0, %v1678
    %1680 = vdwg.mxu0
    %1681 = vrot.lane.b32.xlu0 %v1188, 64
    %v1682 = vpop.permute.xlu0 %1681
    %1683 = vrot.lane.b32.xlu0 %v1191, 64
    %v1684 = vpop.permute.xlu0 %1683
    %v1687 = vmul.f32 %v1634, %v1682
    %v1688 = vmul.f32 %v1637, %v1682
    %v1689 = vmul.f32 %v1640, %v1682
    %v1690 = vmul.f32 %v1643, %v1682
    %v1691 = vmul.f32 %v1646, %v1682
    %v1692 = vmul.f32 %v1649, %v1682
    %v1693 = vmul.f32 %v1652, %v1682
    %v1694 = vmul.f32 %v1655, %v1682
    %v1695 = vmul.f32 %v1658, %v1684
    %v1696 = vmul.f32 %v1661, %v1684
    %v1697 = vmul.f32 %v1664, %v1684
    %v1698 = vmul.f32 %v1667, %v1684
    %v1699 = vmul.f32 %v1670, %v1684
    %v1700 = vmul.f32 %v1673, %v1684
    %v1701 = vmul.f32 %v1676, %v1684
    %v1702 = vmul.f32 %v1679, %v1684
    %v1703 = vsel %vm186, %v1687, 0.0
    %v1704 = vrot.slane %v1703, 4
    %v1705 = vadd.f32 %v1703, %v1704
    %v1706 = vrot.slane %v1705, 2
    %v1707 = vadd.f32 %v1705, %v1706
    %v1708 = vrot.slane %v1707, 1
    %v1709 = vadd.f32 %v1707, %v1708
    %v1710 = vsel %vm186, %v1688, 0.0
    %v1711 = vrot.slane %v1710, 4
    %v1712 = vadd.f32 %v1710, %v1711
    %v1713 = vrot.slane %v1712, 2
    %v1714 = vadd.f32 %v1712, %v1713
    %v1715 = vrot.slane %v1714, 1
    %v1716 = vadd.f32 %v1714, %v1715
    %v1717 = vsel %vm186, %v1689, 0.0
    %v1718 = vrot.slane %v1717, 4
    %v1719 = vadd.f32 %v1717, %v1718
    %v1720 = vrot.slane %v1719, 2
    %v1721 = vadd.f32 %v1719, %v1720
    %v1722 = vrot.slane %v1721, 1
    %v1723 = vadd.f32 %v1721, %v1722
    %v1724 = vsel %vm186, %v1690, 0.0
    %v1725 = vrot.slane %v1724, 4
    %v1726 = vadd.f32 %v1724, %v1725
    %v1727 = vrot.slane %v1726, 2
    %v1728 = vadd.f32 %v1726, %v1727
    %v1729 = vrot.slane %v1728, 1
    %v1730 = vadd.f32 %v1728, %v1729
    %v1731 = vsel %vm186, %v1691, 0.0
    %v1732 = vrot.slane %v1731, 4
    %v1733 = vadd.f32 %v1731, %v1732
    %v1734 = vrot.slane %v1733, 2
    %v1735 = vadd.f32 %v1733, %v1734
    %v1736 = vrot.slane %v1735, 1
    %v1737 = vadd.f32 %v1735, %v1736
    %v1738 = vsel %vm186, %v1692, 0.0
    %v1739 = vrot.slane %v1738, 4
    %v1740 = vadd.f32 %v1738, %v1739
    %v1741 = vrot.slane %v1740, 2
    %v1742 = vadd.f32 %v1740, %v1741
    %v1743 = vrot.slane %v1742, 1
    %v1744 = vadd.f32 %v1742, %v1743
    %v1745 = vsel %vm186, %v1693, 0.0
    %v1746 = vrot.slane %v1745, 4
    %v1747 = vadd.f32 %v1745, %v1746
    %v1748 = vrot.slane %v1747, 2
    %v1749 = vadd.f32 %v1747, %v1748
    %v1750 = vrot.slane %v1749, 1
    %v1751 = vadd.f32 %v1749, %v1750
    %v1752 = vsel %vm186, %v1694, 0.0
    %v1753 = vrot.slane %v1752, 4
    %v1754 = vadd.f32 %v1752, %v1753
    %v1755 = vrot.slane %v1754, 2
    %v1756 = vadd.f32 %v1754, %v1755
    %v1757 = vrot.slane %v1756, 1
    %v1758 = vadd.f32 %v1756, %v1757
    %v1759 = vsel %vm186, %v1695, 0.0
    %v1760 = vrot.slane %v1759, 4
    %v1761 = vadd.f32 %v1759, %v1760
    %v1762 = vrot.slane %v1761, 2
    %v1763 = vadd.f32 %v1761, %v1762
    %v1764 = vrot.slane %v1763, 1
    %v1765 = vadd.f32 %v1763, %v1764
    %v1766 = vsel %vm186, %v1696, 0.0
    %v1767 = vrot.slane %v1766, 4
    %v1768 = vadd.f32 %v1766, %v1767
    %v1769 = vrot.slane %v1768, 2
    %v1770 = vadd.f32 %v1768, %v1769
    %v1771 = vrot.slane %v1770, 1
    %v1772 = vadd.f32 %v1770, %v1771
    %v1773 = vsel %vm186, %v1697, 0.0
    %v1774 = vrot.slane %v1773, 4
    %v1775 = vadd.f32 %v1773, %v1774
    %v1776 = vrot.slane %v1775, 2
    %v1777 = vadd.f32 %v1775, %v1776
    %v1778 = vrot.slane %v1777, 1
    %v1779 = vadd.f32 %v1777, %v1778
    %v1780 = vsel %vm186, %v1698, 0.0
    %v1781 = vrot.slane %v1780, 4
    %v1782 = vadd.f32 %v1780, %v1781
    %v1783 = vrot.slane %v1782, 2
    %v1784 = vadd.f32 %v1782, %v1783
    %v1785 = vrot.slane %v1784, 1
    %v1786 = vadd.f32 %v1784, %v1785
    %v1787 = vsel %vm186, %v1699, 0.0
    %v1788 = vrot.slane %v1787, 4
    %v1789 = vadd.f32 %v1787, %v1788
    %v1790 = vrot.slane %v1789, 2
    %v1791 = vadd.f32 %v1789, %v1790
    %v1792 = vrot.slane %v1791, 1
    %v1793 = vadd.f32 %v1791, %v1792
    %v1794 = vsel %vm186, %v1700, 0.0
    %v1795 = vrot.slane %v1794, 4
    %v1796 = vadd.f32 %v1794, %v1795
    %v1797 = vrot.slane %v1796, 2
    %v1798 = vadd.f32 %v1796, %v1797
    %v1799 = vrot.slane %v1798, 1
    %v1800 = vadd.f32 %v1798, %v1799
    %v1801 = vsel %vm186, %v1701, 0.0
    %v1802 = vrot.slane %v1801, 4
    %v1803 = vadd.f32 %v1801, %v1802
    %v1804 = vrot.slane %v1803, 2
    %v1805 = vadd.f32 %v1803, %v1804
    %v1806 = vrot.slane %v1805, 1
    %v1807 = vadd.f32 %v1805, %v1806
    %v1808 = vsel %vm186, %v1702, 0.0
    %v1809 = vrot.slane %v1808, 4
    %v1810 = vadd.f32 %v1808, %v1809
    %v1811 = vrot.slane %v1810, 2
    %v1812 = vadd.f32 %v1810, %v1811
    %v1813 = vrot.slane %v1812, 1
    %v1814 = vadd.f32 %v1812, %v1813
    %s1815 = scalar_lea.vmem %s3, 32
    %v1816 = vld [vmem:[%s1815] sm:$0xff]
    %v1817 = vld [vmem:[%s1815 + $0x8] sm:$0xff]
    %v1818 = vld [vmem:[%s1815 + $0x10] sm:$0xff]
    %v1819 = vld [vmem:[%s1815 + $0x18] sm:$0xff]
    %v1836 = vsel %vm924, %v1716, %v1709
    %v1837 = vsel %vm926, %v1723, %v1836
    %v1838 = vsel %vm928, %v1730, %v1837
    %v1839 = vsel %vm930, %v1737, %v1838
    %v1840 = vsel %vm932, %v1744, %v1839
    %v1841 = vsel %vm934, %v1751, %v1840
    %v1842 = vsel %vm936, %v1758, %v1841
    %v1843 = vsel %vm924, %v1772, %v1765
    %v1844 = vsel %vm926, %v1779, %v1843
    %v1845 = vsel %vm928, %v1786, %v1844
    %v1846 = vsel %vm930, %v1793, %v1845
    %v1847 = vsel %vm932, %v1800, %v1846
    %v1848 = vsel %vm934, %v1807, %v1847
    %v1849 = vsel %vm936, %v1814, %v1848
    %v1850 = vsel %vm186, %v1842, 0
    %v1852 = vsel %vm186, %v1849, 0
    %1854 = vmatpush.msra.mxu0 0.0
    %1855 = vmatpush.msra.mxu0 0.0
    %1856 = vmatpush.msra.mxu0 0.0
    %1857 = vmatpush.msra.mxu0 0.0
    %1858 = vmatpush.msra.mxu0 0.0
    %1859 = vmatpush.msra.mxu0 0.0
    %1860 = vmatpush.msra.mxu0 0.0
    %1861 = vmatpush.msra.mxu0 0.0
    %1862 = vmatpush.msra.mxu0 0.0
    %1863 = vmatpush.msra.mxu0 0.0
    %1864 = vmatpush.msra.mxu0 0.0
    %1865 = vmatpush.msra.mxu0 0.0
    %1866 = vmatpush.msra.mxu0 %v1819
    %1867 = vmatpush.msra.mxu0 %v1818
    %1868 = vmatpush.msra.mxu0 %v1817
    %1869 = vmatpush.msra.mxu0 %v1816
    %1870 = vmatmul.f32.gmra.mxu0 %v1850
    %v1871 = vpop.f32.mrf.mxu0
    %v1872 = vadd.f32 0.0, %v1871
    %1873 = vmatmul.f32.gmra.mxu0 %v1852
    %v1874 = vpop.f32.mrf.mxu0
    %v1875 = vadd.f32 0.0, %v1874
    %1876 = vdwg.mxu0
    %v1877 = vadd.f32 %v1105, %v1872
    %v1878 = vadd.f32 %v1106, %v1875
    %v1879 = vperm.slane %v1108, 4
    %v1880 = vadd.f32 %v1877, %v1879
    %v1881 = vadd.f32 %v1878, %v1879
    %v1882 = vsel %vm186, %v1880, 0.0
    %1883 = vadd.xlane.f32.xlu0 %v1882
    %v1884 = vpop.xlane.xlu0 %1883
    %v1885 = vsel %vm186, %v1881, 0.0
    %1886 = vadd.xlane.f32.xlu0 %v1885
    %v1887 = vpop.xlane.xlu0 %1886
    %v1888 = vmul.f32 %v1884, %v199
    %v1889 = vmul.f32 %v1887, %v199
    %v1890 = vsub.f32 %v1880, %v1888
    %v1891 = vsub.f32 %v1881, %v1889
    %v1892 = vmul.f32 %v1890, %v1890
    %v1893 = vmul.f32 %v1891, %v1891
    %v1894 = vsel %vm186, %v1892, 0.0
    %1895 = vadd.xlane.f32.xlu0 %v1894
    %v1896 = vpop.xlane.xlu0 %1895
    %v1897 = vsel %vm186, %v1893, 0.0
    %1898 = vadd.xlane.f32.xlu0 %v1897
    %v1899 = vpop.xlane.xlu0 %1898
    %v1900 = vmul.f32 %v1896, %v199
    %v1901 = vmul.f32 %v1899, %v199
    %v1902 = vadd.f32 %v1900, 1e-05
    %v1903 = vadd.f32 %v1901, 1e-05
    %v1904 = vrsqrt.pop %v1902
    %v1905 = vmul.f32 %v1904, %v1902
    %v1906 = vmul.f32 %v1905, %v1904
    %v1907 = vmul.f32 0.5, %v1906
    %v1908 = vsub.f32 1.5, %v1907
    %v1909 = vmul.f32 %v1904, %v1908
    %vm1910 = vweird.f32 %v1902
    %vm1911 = vweird.f32 %v1904
    %vm1912 = vmor %vm1910, %vm1911
    %v1913 = vsel %vm1912, %v1904, %v1909
    %v1914 = vrsqrt.pop %v1903
    %v1915 = vmul.f32 %v1914, %v1903
    %v1916 = vmul.f32 %v1915, %v1914
    %v1917 = vmul.f32 0.5, %v1916
    %v1918 = vsub.f32 1.5, %v1917
    %v1919 = vmul.f32 %v1914, %v1918
    %vm1920 = vweird.f32 %v1903
    %vm1921 = vweird.f32 %v1914
    %vm1922 = vmor %vm1920, %vm1921
    %v1923 = vsel %vm1922, %v1914, %v1919
    %v1924 = vmul.f32 %v1890, %v1913
    %v1925 = vmul.f32 %v1891, %v1923
    %v1926 = vperm.slane %v1108, 2
    %v1927 = vmul.f32 %v1924, %v1926
    %v1928 = vmul.f32 %v1925, %v1926
    %v1929 = vperm.slane %v1108, 3
    %v1930 = vadd.f32 %v1927, %v1929
    %v1931 = vadd.f32 %v1928, %v1929
    %s1932 = scalar_lea.vmem %s4, 32
    %v1933 = vld [vmem:[%s1932] sm:$0xff]
    %v1934 = vld [vmem:[%s1932 + $0x8] sm:$0xff]
    %v1935 = vld [vmem:[%s1932 + $0x10] sm:$0xff]
    %v1936 = vld [vmem:[%s1932 + $0x18] sm:$0xff]
    %v1937 = vperm.slane %v1108, 6
    %v1939 = vsel %vm186, %v1930, 0
    %v1942 = vsel %vm186, %v1931, 0
    %1944 = vmatpush.msra.mxu0 0.0
    %1945 = vmatpush.msra.mxu0 0.0
    %1946 = vmatpush.msra.mxu0 0.0
    %1947 = vmatpush.msra.mxu0 0.0
    %1948 = vmatpush.msra.mxu0 0.0
    %1949 = vmatpush.msra.mxu0 0.0
    %1950 = vmatpush.msra.mxu0 0.0
    %1951 = vmatpush.msra.mxu0 0.0
    %1952 = vmatpush.msra.mxu0 0.0
    %1953 = vmatpush.msra.mxu0 0.0
    %1954 = vmatpush.msra.mxu0 0.0
    %1955 = vmatpush.msra.mxu0 0.0
    %1956 = vmatpush.msra.mxu0 %v1936
    %1957 = vmatpush.msra.mxu0 %v1935
    %1958 = vmatpush.msra.mxu0 %v1934
    %1959 = vmatpush.msra.mxu0 %v1933
    %1960 = vmatmul.f32.gmra.mxu0 %v1939
    %v1961 = vpop.f32.mrf.mxu0
    %v1962 = vadd.f32 %v1937, %v1961
    %1963 = vmatmul.f32.gmra.mxu0 %v1942
    %v1964 = vpop.f32.mrf.mxu0
    %v1965 = vadd.f32 %v1937, %v1964
    %1966 = vdwg.mxu0
    %v1967 = vmax.f32 %v1962, 0.0
    %v1968 = vmax.f32 %v1965, 0.0
    %s1969 = scalar_lea.vmem %s5, 128
    %v1970 = vld [vmem:[%s1969] sm:$0xff]
    %v1971 = vld [vmem:[%s1969 + $0x8] sm:$0xff]
    %v1972 = vld [vmem:[%s1969 + $0x10] sm:$0xff]
    %v1973 = vld [vmem:[%s1969 + $0x18] sm:$0xff]
    %v1974 = vld [vmem:[%s1969 + $0x20] sm:$0xff]
    %v1975 = vld [vmem:[%s1969 + $0x28] sm:$0xff]
    %v1976 = vld [vmem:[%s1969 + $0x30] sm:$0xff]
    %v1977 = vld [vmem:[%s1969 + $0x38] sm:$0xff]
    %v1978 = vld [vmem:[%s1969 + $0x40] sm:$0xff]
    %v1979 = vld [vmem:[%s1969 + $0x48] sm:$0xff]
    %v1980 = vld [vmem:[%s1969 + $0x50] sm:$0xff]
    %v1981 = vld [vmem:[%s1969 + $0x58] sm:$0xff]
    %v1982 = vld [vmem:[%s1969 + $0x60] sm:$0xff]
    %v1983 = vld [vmem:[%s1969 + $0x68] sm:$0xff]
    %v1984 = vld [vmem:[%s1969 + $0x70] sm:$0xff]
    %v1985 = vld [vmem:[%s1969 + $0x78] sm:$0xff]
    %1986 = vmatpush.msra.mxu0 %v1985
    %1987 = vmatpush.msra.mxu0 %v1984
    %1988 = vmatpush.msra.mxu0 %v1983
    %1989 = vmatpush.msra.mxu0 %v1982
    %1990 = vmatpush.msra.mxu0 %v1981
    %1991 = vmatpush.msra.mxu0 %v1980
    %1992 = vmatpush.msra.mxu0 %v1979
    %1993 = vmatpush.msra.mxu0 %v1978
    %1994 = vmatpush.msra.mxu0 %v1977
    %1995 = vmatpush.msra.mxu0 %v1976
    %1996 = vmatpush.msra.mxu0 %v1975
    %1997 = vmatpush.msra.mxu0 %v1974
    %1998 = vmatpush.msra.mxu0 %v1973
    %1999 = vmatpush.msra.mxu0 %v1972
    %2000 = vmatpush.msra.mxu0 %v1971
    %2001 = vmatpush.msra.mxu0 %v1970
    %2002 = vmatmul.f32.gmra.mxu0 %v1967
    %v2003 = vpop.f32.mrf.mxu0
    %v2004 = vadd.f32 0.0, %v2003
    %2005 = vmatmul.f32.gmra.mxu0 %v1968
    %v2006 = vpop.f32.mrf.mxu0
    %v2007 = vadd.f32 0.0, %v2006
    %2008 = vdwg.mxu0
    %v2009 = vadd.f32 %v1880, %v2004
    %v2010 = vadd.f32 %v1881, %v2007
    %v2011 = vperm.slane %v1108, 5
    %v2012 = vadd.f32 %v2009, %v2011
    %v2013 = vadd.f32 %v2010, %v2011
    %v2014 = vld [vmem:[%s7] sm:$0xff]
    %v2015 = vld [vmem:[%s7 + $0x8] sm:$0xff]
    %v2016 = vld [vmem:[%s7 + $0x10] sm:$0xff]
    %v2017 = vld [vmem:[%s7 + $0x18] sm:$0xff]
    %v2018 = vld [vmem:[%s7 + $0x20] sm:$0xff]
    %v2019 = vperm.slane %v2018, 0
    %v2021 = vsel %vm186, %v2012, 0
    %v2024 = vsel %vm186, %v2013, 0
    %2026 = vmatpush.msra.mxu0 0.0
    %2027 = vmatpush.msra.mxu0 0.0
    %2028 = vmatpush.msra.mxu0 0.0
    %2029 = vmatpush.msra.mxu0 0.0
    %2030 = vmatpush.msra.mxu0 0.0
    %2031 = vmatpush.msra.mxu0 0.0
    %2032 = vmatpush.msra.mxu0 0.0
    %2033 = vmatpush.msra.mxu0 0.0
    %2034 = vmatpush.msra.mxu0 0.0
    %2035 = vmatpush.msra.mxu0 0.0
    %2036 = vmatpush.msra.mxu0 0.0
    %2037 = vmatpush.msra.mxu0 0.0
    %2038 = vmatpush.msra.mxu0 %v2017
    %2039 = vmatpush.msra.mxu0 %v2016
    %2040 = vmatpush.msra.mxu0 %v2015
    %2041 = vmatpush.msra.mxu0 %v2014
    %2042 = vmatmul.f32.gmra.mxu0 %v2021
    %v2043 = vpop.f32.mrf.mxu0
    %v2044 = vadd.f32 %v2019, %v2043
    %2045 = vmatmul.f32.gmra.mxu0 %v2024
    %v2046 = vpop.f32.mrf.mxu0
    %v2047 = vadd.f32 %v2019, %v2046
    %2048 = vdwg.mxu0
    %2049 = vst [vmem:[#allocation2] sm:$0xff] %v2044
    %2050 = vst [vmem:[#allocation2 + $0x8] sm:$0xff] %v2047
    %vm2051 = vcmp.lt.s32.totalorder %v36, 65
    %v2052 = vsel %vm2051, %v2044, -1e+30
    %v2053 = vsel %vm2051, %v2047, -1e+30
    %2054 = vmax.xlane.f32.xlu0 %v2052
    %v2055 = vpop.xlane.xlu0 %2054
    %2056 = vmax.xlane.f32.xlu0 %v2053
    %v2057 = vpop.xlane.xlu0 %2056
    %v2058 = vsub.f32 %v2052, %v2055
    %v2059 = vsub.f32 %v2053, %v2057
    %v2060 = vmul.f32 %v2058, 1.442695
    %v2061 = vpow.pop %v2060
    %v2062 = vmul.f32 %v2059, 1.442695
    %v2063 = vpow.pop %v2062
    %2064 = vadd.xlane.f32.xlu0 %v2061
    %v2065 = vpop.xlane.xlu0 %2064
    %2066 = vadd.xlane.f32.xlu0 %v2063
    %v2067 = vpop.xlane.xlu0 %2066
    %v2068 = vlog2.pop %v2065
    %v2069 = vmul.f32 %v2068, 0.6931472
    %v2070 = vlog2.pop %v2067
    %v2071 = vmul.f32 %v2070, 0.6931472
    %v2072 = vadd.f32 %v2055, %v2069
    %v2073 = vadd.f32 %v2057, %v2071
    %2074 = vset.pattern.permute.xlu0 1
    %2075 = vperm.xlu0 %2074, %v33
    %v2076 = vpop.permute.xlu0 %2075
    %2077 = vset.pattern.permute.xlu0 1
    %2078 = vperm.xlu0 %2077, %v34
    %v2079 = vpop.permute.xlu0 %2078
    %vm2080 = vcmp.eq.s32.totalorder %v36, %v2076
    %vm2081 = vcmp.eq.s32.totalorder %v36, %v2079
    %v2082 = vsel %vm2080, %v2044, 0.0
    %v2083 = vsel %vm2081, %v2047, 0.0
    %2084 = vadd.xlane.f32.xlu0 %v2082
    %v2085 = vpop.xlane.xlu0 %2084
    %2086 = vadd.xlane.f32.xlu0 %v2083
    %v2087 = vpop.xlane.xlu0 %2086
    %v2088 = vsub.f32 %v2072, %v2085
    %v2089 = vsub.f32 %v2073, %v2087
    %vm2090 = vcmask 7168
    %v2091 = vsel %vm2090, %v2088, 0.0
    %v2092 = vsel %vm2090, %v2089, 0.0
    %v2093 = vadd.f32 %v2091, %v2092
    %2094 = vadd.xlane.f32.xlu0 %v2093
    %v2095 = vpop.xlane.xlu0 %2094
    %v2096 = vrot.slane %v2095, 4
    %v2097 = vadd.f32 %v2095, %v2096
    %v2098 = vrot.slane %v2097, 2
    %v2099 = vadd.f32 %v2097, %v2098
    %v2100 = vrot.slane %v2099, 1
    %v2101 = vadd.f32 %v2099, %v2100
    %s2102 = vtos %v2101
    %v2103 = vstv %s2102
    %v2104 = vrcp.pop 16.0
    %v2105 = vmul.f32 16.0, %v2104
    %v2106 = vsub.f32 1.0, %v2105
    %v2107 = vmul.f32 %v2104, %v2106
    %v2108 = vadd.f32 %v2104, %v2107
    %vm2109 = vweird.f32 %v2104
    %v2110 = vsel %vm2109, %v2104, %v2108
    %v2111 = vmul.f32 %v2103, %v2110
    %vm2112 = vcmask 0
    %2113 = vst.msk [vmem:[#allocation4] sm:$0x1] %vm2112, %v2111
    // Predicated region
    $region34: #{tpu_custom_call.1} parent=1 // pred_check
      _
    $region35: #{tpu_custom_call.1} parent=1 // pred_check_branch
      %2115 = sbr.rel (0) target = $region37
    $region36: #{tpu_custom_call.1} parent=1 // pred_region
      %2117 = vsyncadd [#allocation3], 0
      %s2118 = sshll.u32 [#allocation2], 4
      %s2119 = int_to_ptr.vmem [resolvable:$true] %s2118
      %s2120 = sshll.u32 %s8, 4
      %s2121 = int_to_ptr.hbm [resolvable:$true] %s2120
      %2126 = dma.vmem_to_hbm [thread:$0]  %s2119, 256, %s2121, [#allocation3], 128, 128, 8
    $region37: #{tpu_custom_call.1} parent=1 // pred_fallthru
      _
    // Predicated region
    $region38: #{tpu_custom_call.1} parent=1 // pred_check
      _
    $region39: #{tpu_custom_call.1} parent=1 // pred_check_branch
      %2128 = sbr.rel (0) target = $region41
    $region40: #{tpu_custom_call.1} parent=1 // pred_region
      %2130 = vsyncadd [#allocation5], 0
      %s2132 = sshll.u32 [#allocation4], 4
      %s2133 = int_to_ptr.vmem [resolvable:$true] %s2132
      %s2134 = sshll.u32 %s9, 4
      %s2135 = int_to_ptr.hbm [resolvable:$true] %s2134
      %2137 = dma.vmem_to_hbm [thread:$0]  %s2133, 16, %s2135, [#allocation5]
    $region41: #{tpu_custom_call.1} parent=1 // pred_fallthru
      _
    // Predicated region
    $region42: #{tpu_custom_call.1} parent=1 // pred_check
      _
    $region43: #{tpu_custom_call.1} parent=1 // pred_check_branch
      %2139 = sbr.rel (0) target = $region45
    $region44: #{tpu_custom_call.1} parent=1 // pred_region
      %2141 = dma.done [#allocation3], 256
    $region45: #{tpu_custom_call.1} parent=1 // pred_fallthru
      _
    // Predicated region
    $region46: #{tpu_custom_call.1} parent=1 // pred_check
      _
    $region47: #{tpu_custom_call.1} parent=1 // pred_check_branch
      %2143 = sbr.rel (0) target = $region49
    $region48: #{tpu_custom_call.1} parent=1 // pred_region
      %2145 = dma.done [#allocation5], 16
    $region49: #{tpu_custom_call.1} parent=1 // pred_fallthru
      _
    %2146 = vsyncpa [#allocation3], 1
    %2147 = vsyncpa [#allocation5], 1

</llo_original>
